<compile_context>
chip_gen: v7x
topology: tpu7x:2x2x1
jax: 0.10.0
libtpu: 0.0.40
codegen_flags: <defaults>
</compile_context>

<pallas_src>
import numpy as np
import jax
import jax.numpy as jnp
from jax.experimental import pallas as pl
from jax.experimental.pallas import tpu as pltpu

# ------------------------- metric constants ---------------------------------
SSIM_WIN = 11
SSIM_SIGMA = 1.5
SSIM_K1, SSIM_K2 = 0.01, 0.03
DATA_RANGE = 1.0

# official LPIPS input normalization (scaling layer of the 'vgg' net)
LPIPS_SHIFT = (-0.030, -0.088, -0.188)
LPIPS_SCALE = (0.458, 0.448, 0.450)
LPIPS_EPS = 1e-10
LPIPS_C1 = 4   # stage-1 feature channels (reduced VGG)
LPIPS_C2 = 8   # stage-2 feature channels (reduced VGG)


# ------------------------- host-side constant builders ----------------------
def _gaussian_1d(win, sigma):
    g = np.exp(-((np.arange(win) - win // 2) ** 2) / (2.0 * sigma ** 2))
    return (g / g.sum()).astype(np.float64)


def _blur_matrix(H, W):
    """Dense 'valid' 11x11 gaussian-window operator, (H*W, Ho*Wo)."""
    g = _gaussian_1d(SSIM_WIN, SSIM_SIGMA)
    g2 = np.outer(g, g)
    Ho, Wo = H - SSIM_WIN + 1, W - SSIM_WIN + 1
    bt = np.zeros((H * W, Ho * Wo), np.float32)
    for ro in range(Ho):
        for co in range(Wo):
            q = ro * Wo + co
            for kr in range(SSIM_WIN):
                row0 = (ro + kr) * W + co
                bt[row0:row0 + SSIM_WIN, q] = g2[kr, :]
    return bt


def _valid_masks(H, W):
    """Mean-normalized validity masks for the two LPIPS conv stages, (2, H*W)."""
    rr = np.arange(H)[:, None]
    cc = np.arange(W)[None, :]
    m1 = ((rr < H - 2) & (cc < W - 2)).astype(np.float32)
    m2 = ((rr < H - 4) & (cc < W - 4)).astype(np.float32)
    m1 /= m1.sum()
    m2 /= m2.sum()
    return np.stack([m1.reshape(-1), m2.reshape(-1)], axis=0).astype(np.float32)


def _init_lpips_params(C):
    k = jax.random.split(jax.random.PRNGKey(42), 6)
    w1 = 0.30 * jax.random.normal(k[0], (LPIPS_C1, C, 3, 3), jnp.float32)
    b1 = 0.05 * jax.random.normal(k[1], (LPIPS_C1,), jnp.float32)
    w2 = 0.20 * jax.random.normal(k[2], (LPIPS_C2, LPIPS_C1, 3, 3), jnp.float32)
    b2 = 0.05 * jax.random.normal(k[3], (LPIPS_C2,), jnp.float32)
    lin1 = 0.5 * jnp.abs(jax.random.normal(k[4], (LPIPS_C1,), jnp.float32))
    lin2 = 0.5 * jnp.abs(jax.random.normal(k[5], (LPIPS_C2,), jnp.float32))
    return tuple(np.asarray(a) for a in (w1, b1, w2, b2, lin1, lin2))


def _lpips_matrices(C):
    """Reshape conv weights to (cout, 9*cin) matmul form and fold the LPIPS
    input normalization x -> (2x - 1 - shift)/scale into stage-1 weights."""
    w1, b1, w2, b2, lin1, lin2 = _init_lpips_params(C)
    scale = np.asarray(LPIPS_SCALE, np.float32)
    shift = np.asarray(LPIPS_SHIFT, np.float32)
    a = 2.0 / scale                       # per-input-channel multiplier
    o = (-1.0 - shift) / scale            # per-input-channel offset
    # column order of the patch stack is shift-major, channel-minor
    w1m = np.transpose(w1, (0, 2, 3, 1)).reshape(LPIPS_C1, 9 * C)
    b1f = b1 + w1m @ np.tile(o, 9)        # use un-scaled weights for the offset
    w1m = w1m * np.tile(a, 9)[None, :]
    w2m = np.transpose(w2, (0, 2, 3, 1)).reshape(LPIPS_C2, 9 * LPIPS_C1)
    return (w1m.astype(np.float32),
            b1f.reshape(LPIPS_C1, 1).astype(np.float32),
            w2m.astype(np.float32),
            b2.reshape(LPIPS_C2, 1).astype(np.float32),
            lin1.reshape(LPIPS_C1, 1).astype(np.float32),
            lin2.reshape(LPIPS_C2, 1).astype(np.float32))


# ------------------------- kernel builder ------------------------------------
def _make_kernel(C, W, HW):
    c1 = (SSIM_K1 * DATA_RANGE) ** 2
    c2 = (SSIM_K2 * DATA_RANGE) ** 2
    inv_ln10 = 1.0 / float(np.log(10.0))
    # flattened-row stride shifts for the 3x3 conv window
    shifts = [di * W + dj for di in range(3) for dj in range(3)]

    def lane_shift(buf, off):
        # roll left along the lane axis by `off` (with wraparound).  The
        # wrapped lanes only land on spatially-invalid output positions,
        # which are masked out of the spatial means.
        if off == 0:
            return buf
        return jnp.concatenate([buf[:, off:], buf[:, :off]], axis=1)

    def conv_stage(feat, w_ref, b_ref):
        # feat: (cin, 2*HW) -> relu( W(cout, 9*cin) @ patches(9*cin, 2*HW) + b )
        patches = jnp.concatenate([lane_shift(feat, off) for off in shifts],
                                  axis=0)
        out = jnp.dot(w_ref[...], patches, preferred_element_type=jnp.float32)
        return jnp.maximum(out + b_ref[...], 0.0)

    def unit_normalize(feat):
        # per spatial position (lane), normalize over channels (sublanes)
        nrm = jnp.sum(feat * feat, axis=0, keepdims=True)        # (1, 2*HW)
        inv = pl.reciprocal(jnp.sqrt(nrm) + LPIPS_EPS, approx=True)
        return feat * inv

    def kernel(xy_ref, blur_ref, mask_ref, w1_ref, b1_ref, w2_ref, b2_ref,
               lin1_ref, lin2_ref, ssim_ref, psnr_ref, lpips_ref):
        xy = xy_ref[0]                       # (C, 2*HW): lanes [0,HW)=x, rest=y
        xf = xy[:, :HW]
        yf = xy[:, HW:]

        # ------------------------------ PSNR ------------------------------
        d = xf - yf
        mse = jnp.sum(d * d) * (1.0 / float(C * HW))
        psnr = (10.0 * inv_ln10) * jnp.log((DATA_RANGE * DATA_RANGE) / mse)

        # ------------------------------ SSIM ------------------------------
        # one MXU matmul blurs all 15 operand maps (x, y, x^2, y^2, xy per ch)
        maps = jnp.concatenate([xf, yf, xf * xf, yf * yf, xf * yf], axis=0)
        blur = jnp.dot(maps, blur_ref[...],
                       preferred_element_type=jnp.float32)       # (5C, Ho*Wo)
        mu_x, mu_y = blur[0:C], blur[C:2 * C]
        exx, eyy, exy = blur[2 * C:3 * C], blur[3 * C:4 * C], blur[4 * C:5 * C]
        sxx = exx - mu_x * mu_x
        syy = eyy - mu_y * mu_y
        sxy = exy - mu_x * mu_y
        num = (2.0 * mu_x * mu_y + c1) * (2.0 * sxy + c2)
        den = (mu_x * mu_x + mu_y * mu_y + c1) * (sxx + syy + c2)
        ssim = jnp.mean(num * pl.reciprocal(den, approx=True))

        # ------------------------------ LPIPS -----------------------------
        f1 = conv_stage(xy, w1_ref, b1_ref)          # (C1, 2*HW)
        f2 = conv_stage(f1, w2_ref, b2_ref)          # (C2, 2*HW)
        n1 = unit_normalize(f1)
        n2 = unit_normalize(f2)
        d1 = n1[:, :HW] - n1[:, HW:]
        d2 = n2[:, :HW] - n2[:, HW:]
        m1 = mask_ref[0:1, :]                        # masks carry 1/n_valid
        m2 = mask_ref[1:2, :]
        lp = (jnp.sum(d1 * d1 * lin1_ref[...] * m1)
              + jnp.sum(d2 * d2 * lin2_ref[...] * m2))

        # -------- per-sample lane-dense scalar stores ((1, 8, 128) tiles) --
        ssim_ref[...] = jnp.broadcast_to(ssim, ssim_ref.shape)
        psnr_ref[...] = jnp.broadcast_to(psnr, psnr_ref.shape)
        lpips_ref[...] = jnp.broadcast_to(lp, lpips_ref.shape)

    return kernel


# ------------------------- wrapper (the "forward") ---------------------------
def image_metrics(x, y):
    """Pallas equivalent of ImageMetrics(metrics=('ssim','psnr','lpips'))(x, y)."""
    N, C, H, W = x.shape
    assert C == 3, "LPIPS normalization constants assume RGB (C=3)"
    assert H >= SSIM_WIN and W >= SSIM_WIN
    HW = H * W

    blur_t = _blur_matrix(H, W)                          # (HW, Ho*Wo)
    masks = _valid_masks(H, W)                           # (2, HW)
    w1m, b1c, w2m, b2c, lin1c, lin2c = _lpips_matrices(C)

    x = x.astype(jnp.float32)
    y = y.astype(jnp.float32)
    # flatten spatial onto the lane axis and pack x/y side by side (wrapper-side
    # reshape keeps the kernel free of relayouts)
    xy = jnp.concatenate([x.reshape(N, C, HW), y.reshape(N, C, HW)], axis=2)

    kernel = _make_kernel(C, W, HW)

    def const_spec(shape):
        return pl.BlockSpec(shape, lambda n: (0, 0))

    out_spec = pl.BlockSpec((1, 8, 128), lambda n: (n, 0, 0))
    out_shapes = tuple(jax.ShapeDtypeStruct((N, 8, 128), jnp.float32)
                       for _ in range(3))

    ssim, psnr, lpips = pl.pallas_call(
        kernel,
        out_shape=out_shapes,
        grid_spec=pltpu.PrefetchScalarGridSpec(
            num_scalar_prefetch=0,
            grid=(N,),
            in_specs=[
                pl.BlockSpec((1, C, 2 * HW), lambda n: (n, 0, 0)),   # xy
                const_spec(blur_t.shape),                            # blur op
                const_spec(masks.shape),                             # masks
                const_spec(w1m.shape),                               # conv1 W
                const_spec(b1c.shape),                               # conv1 b
                const_spec(w2m.shape),                               # conv2 W
                const_spec(b2c.shape),                               # conv2 b
                const_spec(lin1c.shape),                             # lin1
                const_spec(lin2c.shape),                             # lin2
            ],
            out_specs=[out_spec, out_spec, out_spec],
        ),
        compiler_params=pltpu.CompilerParams(
            dimension_semantics=("parallel",)),
    )(xy, jnp.asarray(blur_t), jnp.asarray(masks), jnp.asarray(w1m),
      jnp.asarray(b1c), jnp.asarray(w2m), jnp.asarray(b2c),
      jnp.asarray(lin1c), jnp.asarray(lin2c))

    return {"ssim": ssim[:, 0, 0], "psnr": psnr[:, 0, 0], "lpips": lpips[:, 0, 0]}


if __name__ == "__main__":
    key = jax.random.PRNGKey(0)
    kx, ky = jax.random.split(key)
    N, C, H, W = 2, 3, 16, 16
    x = jax.random.uniform(kx, (N, C, H, W), jnp.float32)
    y = jnp.clip(x + 0.05 * jax.random.normal(ky, (N, C, H, W), jnp.float32),
                 0.0, 1.0)

    out = image_metrics(x, y)
    out = jax.block_until_ready(out)

    assert out["ssim"].shape == (N,)
    assert out["psnr"].shape == (N,)
    assert out["lpips"].shape == (N,)
    assert all(bool(jnp.all(jnp.isfinite(v))) for v in out.values())
    print("KERNEL_OK")
</pallas_src>

<mosaic_0001>
module attributes {stable_mosaic.version = 11 : i64} {
  func.func @kernel(%arg0: i32, %arg1: memref<1x3x512xf32, #tpu.memory_space<vmem>>, %arg2: memref<256x36xf32, #tpu.memory_space<vmem>>, %arg3: memref<2x256xf32, #tpu.memory_space<vmem>>, %arg4: memref<4x27xf32, #tpu.memory_space<vmem>>, %arg5: memref<4x1xf32, #tpu.memory_space<vmem>>, %arg6: memref<8x36xf32, #tpu.memory_space<vmem>>, %arg7: memref<8x1xf32, #tpu.memory_space<vmem>>, %arg8: memref<4x1xf32, #tpu.memory_space<vmem>>, %arg9: memref<8x1xf32, #tpu.memory_space<vmem>>, %arg10: memref<1x8x128xf32, #tpu.memory_space<vmem>>, %arg11: memref<1x8x128xf32, #tpu.memory_space<vmem>>, %arg12: memref<1x8x128xf32, #tpu.memory_space<vmem>>) attributes {dimension_semantics = [#tpu.dimension_semantics<parallel>], iteration_bounds = array<i64: 2>, scalar_prefetch = 0 : i64, scratch_operands = 0 : i64, tpu.core_type = #tpu.core_type<tc>, window_params = [{transform_indices = @transform_0, window_bounds = array<i64: 1, 3, 512>}, {pipeline_mode = #tpu.pipeline_mode<synchronous>, transform_indices = @transform_1, window_bounds = array<i64: 256, 36>}, {pipeline_mode = #tpu.pipeline_mode<synchronous>, transform_indices = @transform_2, window_bounds = array<i64: 2, 256>}, {pipeline_mode = #tpu.pipeline_mode<synchronous>, transform_indices = @transform_3, window_bounds = array<i64: 4, 27>}, {pipeline_mode = #tpu.pipeline_mode<synchronous>, transform_indices = @transform_4, window_bounds = array<i64: 4, 1>}, {pipeline_mode = #tpu.pipeline_mode<synchronous>, transform_indices = @transform_5, window_bounds = array<i64: 8, 36>}, {pipeline_mode = #tpu.pipeline_mode<synchronous>, transform_indices = @transform_6, window_bounds = array<i64: 8, 1>}, {pipeline_mode = #tpu.pipeline_mode<synchronous>, transform_indices = @transform_7, window_bounds = array<i64: 4, 1>}, {pipeline_mode = #tpu.pipeline_mode<synchronous>, transform_indices = @transform_8, window_bounds = array<i64: 8, 1>}, {transform_indices = @transform_9, window_bounds = array<i64: 1, 8, 128>}, {transform_indices = @transform_10, window_bounds = array<i64: 1, 8, 128>}, {transform_indices = @transform_11, window_bounds = array<i64: 1, 8, 128>}]} {
    %c0 = arith.constant 0 : index
    %c0_0 = arith.constant 0 : index
    %c0_1 = arith.constant 0 : index
    %0 = vector.load %arg1[%c0, %c0_0, %c0_1] : memref<1x3x512xf32, #tpu.memory_space<vmem>>, vector<1x3x512xf32>
    %1 = vector.shape_cast %0 : vector<1x3x512xf32> to vector<3x512xf32>
    %2 = vector.extract_strided_slice %1 {offsets = [0, 0], sizes = [3, 256], strides = [1, 1]} : vector<3x512xf32> to vector<3x256xf32>
    %3 = vector.extract_strided_slice %1 {offsets = [0, 256], sizes = [3, 256], strides = [1, 1]} : vector<3x512xf32> to vector<3x256xf32>
    %4 = arith.subf %2, %3 : vector<3x256xf32>
    %5 = arith.mulf %4, %4 : vector<3x256xf32>
    %6 = vector.shape_cast %5 : vector<3x256xf32> to vector<1x3x256xf32>
    %cst = arith.constant dense<0.000000e+00> : vector<1xf32>
    %7 = vector.multi_reduction <add>, %6, %cst [1, 2] : vector<1x3x256xf32> to vector<1xf32>
    %8 = vector.shape_cast %7 : vector<1xf32> to vector<1x1x1xf32>
    %9 = vector.extract %8[0, 0, 0] : f32 from vector<1x1x1xf32>
    %cst_2 = arith.constant 0.00130208337 : f32
    %10 = arith.mulf %9, %cst_2 : f32
    %cst_3 = arith.constant 1.000000e+00 : f32
    %11 = arith.divf %cst_3, %10 : f32
    %12 = math.log %11 : f32
    %cst_4 = arith.constant 4.34294462 : f32
    %13 = arith.mulf %cst_4, %12 : f32
    %14 = arith.mulf %2, %2 : vector<3x256xf32>
    %15 = arith.mulf %3, %3 : vector<3x256xf32>
    %16 = arith.mulf %2, %3 : vector<3x256xf32>
    %17 = tpu.concatenate %2, %3, %14, %15, %16 in 0 : vector<3x256xf32>, vector<3x256xf32>, vector<3x256xf32>, vector<3x256xf32>, vector<3x256xf32> -> vector<15x256xf32>
    %c0_5 = arith.constant 0 : index
    %c0_6 = arith.constant 0 : index
    %18 = vector.load %arg2[%c0_5, %c0_6] : memref<256x36xf32, #tpu.memory_space<vmem>>, vector<256x36xf32>
    %cst_7 = arith.constant dense<0.000000e+00> : vector<15x36xf32>
    %19 = tpu.matmul %17, %18, %cst_7 {dimension_numbers = #tpu.dot_dimension_numbers<[1], [0], [0], [1], [0, 0, 1, 1], [], []>} : vector<15x256xf32>, vector<256x36xf32>, vector<15x36xf32> -> vector<15x36xf32>
    %20 = vector.extract_strided_slice %19 {offsets = [0, 0], sizes = [3, 36], strides = [1, 1]} : vector<15x36xf32> to vector<3x36xf32>
    %21 = vector.extract_strided_slice %19 {offsets = [3, 0], sizes = [3, 36], strides = [1, 1]} : vector<15x36xf32> to vector<3x36xf32>
    %22 = vector.extract_strided_slice %19 {offsets = [6, 0], sizes = [3, 36], strides = [1, 1]} : vector<15x36xf32> to vector<3x36xf32>
    %23 = vector.extract_strided_slice %19 {offsets = [9, 0], sizes = [3, 36], strides = [1, 1]} : vector<15x36xf32> to vector<3x36xf32>
    %24 = vector.extract_strided_slice %19 {offsets = [12, 0], sizes = [3, 36], strides = [1, 1]} : vector<15x36xf32> to vector<3x36xf32>
    %25 = arith.mulf %20, %20 : vector<3x36xf32>
    %26 = arith.subf %22, %25 : vector<3x36xf32>
    %27 = arith.mulf %21, %21 : vector<3x36xf32>
    %28 = arith.subf %23, %27 : vector<3x36xf32>
    %29 = arith.mulf %20, %21 : vector<3x36xf32>
    %30 = arith.subf %24, %29 : vector<3x36xf32>
    %cst_8 = arith.constant 2.000000e+00 : f32
    %31 = vector.broadcast %cst_8 : f32 to vector<3x36xf32>
    %32 = arith.mulf %31, %20 : vector<3x36xf32>
    %33 = arith.mulf %32, %21 : vector<3x36xf32>
    %cst_9 = arith.constant 9.99999974E-5 : f32
    %34 = vector.broadcast %cst_9 : f32 to vector<3x36xf32>
    %35 = arith.addf %33, %34 : vector<3x36xf32>
    %cst_10 = arith.constant 2.000000e+00 : f32
    %36 = vector.broadcast %cst_10 : f32 to vector<3x36xf32>
    %37 = arith.mulf %36, %30 : vector<3x36xf32>
    %cst_11 = arith.constant 8.99999984E-4 : f32
    %38 = vector.broadcast %cst_11 : f32 to vector<3x36xf32>
    %39 = arith.addf %37, %38 : vector<3x36xf32>
    %40 = arith.mulf %35, %39 : vector<3x36xf32>
    %41 = arith.mulf %20, %20 : vector<3x36xf32>
    %42 = arith.mulf %21, %21 : vector<3x36xf32>
    %43 = arith.addf %41, %42 : vector<3x36xf32>
    %cst_12 = arith.constant 9.99999974E-5 : f32
    %44 = vector.broadcast %cst_12 : f32 to vector<3x36xf32>
    %45 = arith.addf %43, %44 : vector<3x36xf32>
    %46 = arith.addf %26, %28 : vector<3x36xf32>
    %cst_13 = arith.constant 8.99999984E-4 : f32
    %47 = vector.broadcast %cst_13 : f32 to vector<3x36xf32>
    %48 = arith.addf %46, %47 : vector<3x36xf32>
    %49 = arith.mulf %45, %48 : vector<3x36xf32>
    %50 = tpu.reciprocal %49 {approx = true} : vector<3x36xf32> -> vector<3x36xf32>
    %51 = arith.mulf %40, %50 : vector<3x36xf32>
    %52 = vector.shape_cast %51 : vector<3x36xf32> to vector<1x3x36xf32>
    %cst_14 = arith.constant dense<0.000000e+00> : vector<1xf32>
    %53 = vector.multi_reduction <add>, %52, %cst_14 [1, 2] : vector<1x3x36xf32> to vector<1xf32>
    %54 = vector.shape_cast %53 : vector<1xf32> to vector<1x1x1xf32>
    %55 = vector.extract %54[0, 0, 0] : f32 from vector<1x1x1xf32>
    %cst_15 = arith.constant 1.080000e+02 : f32
    %56 = arith.divf %55, %cst_15 : f32
    %57 = vector.extract_strided_slice %1 {offsets = [0, 1], sizes = [3, 511], strides = [1, 1]} : vector<3x512xf32> to vector<3x511xf32>
    %58 = vector.extract_strided_slice %1 {offsets = [0, 0], sizes = [3, 1], strides = [1, 1]} : vector<3x512xf32> to vector<3x1xf32>
    %59 = tpu.concatenate %57, %58 in 1 : vector<3x511xf32>, vector<3x1xf32> -> vector<3x512xf32>
    %60 = vector.extract_strided_slice %1 {offsets = [0, 2], sizes = [3, 510], strides = [1, 1]} : vector<3x512xf32> to vector<3x510xf32>
    %61 = vector.extract_strided_slice %1 {offsets = [0, 0], sizes = [3, 2], strides = [1, 1]} : vector<3x512xf32> to vector<3x2xf32>
    %62 = tpu.concatenate %60, %61 in 1 : vector<3x510xf32>, vector<3x2xf32> -> vector<3x512xf32>
    %63 = vector.extract_strided_slice %1 {offsets = [0, 16], sizes = [3, 496], strides = [1, 1]} : vector<3x512xf32> to vector<3x496xf32>
    %64 = vector.extract_strided_slice %1 {offsets = [0, 0], sizes = [3, 16], strides = [1, 1]} : vector<3x512xf32> to vector<3x16xf32>
    %65 = tpu.concatenate %63, %64 in 1 : vector<3x496xf32>, vector<3x16xf32> -> vector<3x512xf32>
    %66 = vector.extract_strided_slice %1 {offsets = [0, 17], sizes = [3, 495], strides = [1, 1]} : vector<3x512xf32> to vector<3x495xf32>
    %67 = vector.extract_strided_slice %1 {offsets = [0, 0], sizes = [3, 17], strides = [1, 1]} : vector<3x512xf32> to vector<3x17xf32>
    %68 = tpu.concatenate %66, %67 in 1 : vector<3x495xf32>, vector<3x17xf32> -> vector<3x512xf32>
    %69 = vector.extract_strided_slice %1 {offsets = [0, 18], sizes = [3, 494], strides = [1, 1]} : vector<3x512xf32> to vector<3x494xf32>
    %70 = vector.extract_strided_slice %1 {offsets = [0, 0], sizes = [3, 18], strides = [1, 1]} : vector<3x512xf32> to vector<3x18xf32>
    %71 = tpu.concatenate %69, %70 in 1 : vector<3x494xf32>, vector<3x18xf32> -> vector<3x512xf32>
    %72 = vector.extract_strided_slice %1 {offsets = [0, 32], sizes = [3, 480], strides = [1, 1]} : vector<3x512xf32> to vector<3x480xf32>
    %73 = vector.extract_strided_slice %1 {offsets = [0, 0], sizes = [3, 32], strides = [1, 1]} : vector<3x512xf32> to vector<3x32xf32>
    %74 = tpu.concatenate %72, %73 in 1 : vector<3x480xf32>, vector<3x32xf32> -> vector<3x512xf32>
    %75 = vector.extract_strided_slice %1 {offsets = [0, 33], sizes = [3, 479], strides = [1, 1]} : vector<3x512xf32> to vector<3x479xf32>
    %76 = vector.extract_strided_slice %1 {offsets = [0, 0], sizes = [3, 33], strides = [1, 1]} : vector<3x512xf32> to vector<3x33xf32>
    %77 = tpu.concatenate %75, %76 in 1 : vector<3x479xf32>, vector<3x33xf32> -> vector<3x512xf32>
    %78 = vector.extract_strided_slice %1 {offsets = [0, 34], sizes = [3, 478], strides = [1, 1]} : vector<3x512xf32> to vector<3x478xf32>
    %79 = vector.extract_strided_slice %1 {offsets = [0, 0], sizes = [3, 34], strides = [1, 1]} : vector<3x512xf32> to vector<3x34xf32>
    %80 = tpu.concatenate %78, %79 in 1 : vector<3x478xf32>, vector<3x34xf32> -> vector<3x512xf32>
    %81 = tpu.concatenate %1, %59, %62, %65, %68, %71, %74, %77, %80 in 0 : vector<3x512xf32>, vector<3x512xf32>, vector<3x512xf32>, vector<3x512xf32>, vector<3x512xf32>, vector<3x512xf32>, vector<3x512xf32>, vector<3x512xf32>, vector<3x512xf32> -> vector<27x512xf32>
    %c0_16 = arith.constant 0 : index
    %c0_17 = arith.constant 0 : index
    %82 = vector.load %arg4[%c0_16, %c0_17] : memref<4x27xf32, #tpu.memory_space<vmem>>, vector<4x27xf32>
    %cst_18 = arith.constant dense<0.000000e+00> : vector<4x512xf32>
    %83 = tpu.matmul %82, %81, %cst_18 {dimension_numbers = #tpu.dot_dimension_numbers<[1], [0], [0], [1], [0, 0, 1, 1], [], []>} : vector<4x27xf32>, vector<27x512xf32>, vector<4x512xf32> -> vector<4x512xf32>
    %c0_19 = arith.constant 0 : index
    %c0_20 = arith.constant 0 : index
    %84 = vector.load %arg5[%c0_19, %c0_20] : memref<4x1xf32, #tpu.memory_space<vmem>>, vector<4x1xf32>
    %85 = vector.broadcast %84 : vector<4x1xf32> to vector<4x512xf32>
    %86 = arith.addf %83, %85 : vector<4x512xf32>
    %cst_21 = arith.constant 0.000000e+00 : f32
    %87 = vector.broadcast %cst_21 : f32 to vector<4x512xf32>
    %88 = arith.maximumf %86, %87 : vector<4x512xf32>
    %89 = vector.extract_strided_slice %88 {offsets = [0, 1], sizes = [4, 511], strides = [1, 1]} : vector<4x512xf32> to vector<4x511xf32>
    %90 = vector.extract_strided_slice %88 {offsets = [0, 0], sizes = [4, 1], strides = [1, 1]} : vector<4x512xf32> to vector<4x1xf32>
    %91 = tpu.concatenate %89, %90 in 1 : vector<4x511xf32>, vector<4x1xf32> -> vector<4x512xf32>
    %92 = vector.extract_strided_slice %88 {offsets = [0, 2], sizes = [4, 510], strides = [1, 1]} : vector<4x512xf32> to vector<4x510xf32>
    %93 = vector.extract_strided_slice %88 {offsets = [0, 0], sizes = [4, 2], strides = [1, 1]} : vector<4x512xf32> to vector<4x2xf32>
    %94 = tpu.concatenate %92, %93 in 1 : vector<4x510xf32>, vector<4x2xf32> -> vector<4x512xf32>
    %95 = vector.extract_strided_slice %88 {offsets = [0, 16], sizes = [4, 496], strides = [1, 1]} : vector<4x512xf32> to vector<4x496xf32>
    %96 = vector.extract_strided_slice %88 {offsets = [0, 0], sizes = [4, 16], strides = [1, 1]} : vector<4x512xf32> to vector<4x16xf32>
    %97 = tpu.concatenate %95, %96 in 1 : vector<4x496xf32>, vector<4x16xf32> -> vector<4x512xf32>
    %98 = vector.extract_strided_slice %88 {offsets = [0, 17], sizes = [4, 495], strides = [1, 1]} : vector<4x512xf32> to vector<4x495xf32>
    %99 = vector.extract_strided_slice %88 {offsets = [0, 0], sizes = [4, 17], strides = [1, 1]} : vector<4x512xf32> to vector<4x17xf32>
    %100 = tpu.concatenate %98, %99 in 1 : vector<4x495xf32>, vector<4x17xf32> -> vector<4x512xf32>
    %101 = vector.extract_strided_slice %88 {offsets = [0, 18], sizes = [4, 494], strides = [1, 1]} : vector<4x512xf32> to vector<4x494xf32>
    %102 = vector.extract_strided_slice %88 {offsets = [0, 0], sizes = [4, 18], strides = [1, 1]} : vector<4x512xf32> to vector<4x18xf32>
    %103 = tpu.concatenate %101, %102 in 1 : vector<4x494xf32>, vector<4x18xf32> -> vector<4x512xf32>
    %104 = vector.extract_strided_slice %88 {offsets = [0, 32], sizes = [4, 480], strides = [1, 1]} : vector<4x512xf32> to vector<4x480xf32>
    %105 = vector.extract_strided_slice %88 {offsets = [0, 0], sizes = [4, 32], strides = [1, 1]} : vector<4x512xf32> to vector<4x32xf32>
    %106 = tpu.concatenate %104, %105 in 1 : vector<4x480xf32>, vector<4x32xf32> -> vector<4x512xf32>
    %107 = vector.extract_strided_slice %88 {offsets = [0, 33], sizes = [4, 479], strides = [1, 1]} : vector<4x512xf32> to vector<4x479xf32>
    %108 = vector.extract_strided_slice %88 {offsets = [0, 0], sizes = [4, 33], strides = [1, 1]} : vector<4x512xf32> to vector<4x33xf32>
    %109 = tpu.concatenate %107, %108 in 1 : vector<4x479xf32>, vector<4x33xf32> -> vector<4x512xf32>
    %110 = vector.extract_strided_slice %88 {offsets = [0, 34], sizes = [4, 478], strides = [1, 1]} : vector<4x512xf32> to vector<4x478xf32>
    %111 = vector.extract_strided_slice %88 {offsets = [0, 0], sizes = [4, 34], strides = [1, 1]} : vector<4x512xf32> to vector<4x34xf32>
    %112 = tpu.concatenate %110, %111 in 1 : vector<4x478xf32>, vector<4x34xf32> -> vector<4x512xf32>
    %113 = tpu.concatenate %88, %91, %94, %97, %100, %103, %106, %109, %112 in 0 : vector<4x512xf32>, vector<4x512xf32>, vector<4x512xf32>, vector<4x512xf32>, vector<4x512xf32>, vector<4x512xf32>, vector<4x512xf32>, vector<4x512xf32>, vector<4x512xf32> -> vector<36x512xf32>
    %c0_22 = arith.constant 0 : index
    %c0_23 = arith.constant 0 : index
    %114 = vector.load %arg6[%c0_22, %c0_23] : memref<8x36xf32, #tpu.memory_space<vmem>>, vector<8x36xf32>
    %cst_24 = arith.constant dense<0.000000e+00> : vector<8x512xf32>
    %115 = tpu.matmul %114, %113, %cst_24 {dimension_numbers = #tpu.dot_dimension_numbers<[1], [0], [0], [1], [0, 0, 1, 1], [], []>} : vector<8x36xf32>, vector<36x512xf32>, vector<8x512xf32> -> vector<8x512xf32>
    %c0_25 = arith.constant 0 : index
    %c0_26 = arith.constant 0 : index
    %116 = vector.load %arg7[%c0_25, %c0_26] : memref<8x1xf32, #tpu.memory_space<vmem>>, vector<8x1xf32>
    %117 = vector.broadcast %116 : vector<8x1xf32> to vector<8x512xf32>
    %118 = arith.addf %115, %117 : vector<8x512xf32>
    %cst_27 = arith.constant 0.000000e+00 : f32
    %119 = vector.broadcast %cst_27 : f32 to vector<8x512xf32>
    %120 = arith.maximumf %118, %119 : vector<8x512xf32>
    %121 = arith.mulf %88, %88 : vector<4x512xf32>
    %cst_28 = arith.constant dense<0.000000e+00> : vector<512xf32>
    %122 = vector.multi_reduction <add>, %121, %cst_28 [0] : vector<4x512xf32> to vector<512xf32>
    %123 = vector.shape_cast %122 : vector<512xf32> to vector<1x512xf32>
    %124 = math.sqrt %123 : vector<1x512xf32>
    %cst_29 = arith.constant 1.000000e-10 : f32
    %125 = vector.broadcast %cst_29 : f32 to vector<1x512xf32>
    %126 = arith.addf %124, %125 : vector<1x512xf32>
    %127 = tpu.reciprocal %126 {approx = true} : vector<1x512xf32> -> vector<1x512xf32>
    %128 = vector.broadcast %127 : vector<1x512xf32> to vector<4x512xf32>
    %129 = arith.mulf %88, %128 : vector<4x512xf32>
    %130 = arith.mulf %120, %120 : vector<8x512xf32>
    %cst_30 = arith.constant dense<0.000000e+00> : vector<512xf32>
    %131 = vector.multi_reduction <add>, %130, %cst_30 [0] : vector<8x512xf32> to vector<512xf32>
    %132 = vector.shape_cast %131 : vector<512xf32> to vector<1x512xf32>
    %133 = math.sqrt %132 : vector<1x512xf32>
    %cst_31 = arith.constant 1.000000e-10 : f32
    %134 = vector.broadcast %cst_31 : f32 to vector<1x512xf32>
    %135 = arith.addf %133, %134 : vector<1x512xf32>
    %136 = tpu.reciprocal %135 {approx = true} : vector<1x512xf32> -> vector<1x512xf32>
    %137 = vector.broadcast %136 : vector<1x512xf32> to vector<8x512xf32>
    %138 = arith.mulf %120, %137 : vector<8x512xf32>
    %139 = vector.extract_strided_slice %129 {offsets = [0, 0], sizes = [4, 256], strides = [1, 1]} : vector<4x512xf32> to vector<4x256xf32>
    %140 = vector.extract_strided_slice %129 {offsets = [0, 256], sizes = [4, 256], strides = [1, 1]} : vector<4x512xf32> to vector<4x256xf32>
    %141 = arith.subf %139, %140 : vector<4x256xf32>
    %142 = vector.extract_strided_slice %138 {offsets = [0, 0], sizes = [8, 256], strides = [1, 1]} : vector<8x512xf32> to vector<8x256xf32>
    %143 = vector.extract_strided_slice %138 {offsets = [0, 256], sizes = [8, 256], strides = [1, 1]} : vector<8x512xf32> to vector<8x256xf32>
    %144 = arith.subf %142, %143 : vector<8x256xf32>
    %c0_32 = arith.constant 0 : index
    %c0_33 = arith.constant 0 : index
    %145 = vector.load %arg3[%c0_32, %c0_33] : memref<2x256xf32, #tpu.memory_space<vmem>>, vector<1x256xf32>
    %c1 = arith.constant 1 : index
    %c0_34 = arith.constant 0 : index
    %146 = vector.load %arg3[%c1, %c0_34] : memref<2x256xf32, #tpu.memory_space<vmem>>, vector<1x256xf32>
    %147 = arith.mulf %141, %141 : vector<4x256xf32>
    %c0_35 = arith.constant 0 : index
    %c0_36 = arith.constant 0 : index
    %148 = vector.load %arg8[%c0_35, %c0_36] : memref<4x1xf32, #tpu.memory_space<vmem>>, vector<4x1xf32>
    %149 = vector.broadcast %148 : vector<4x1xf32> to vector<4x256xf32>
    %150 = arith.mulf %147, %149 : vector<4x256xf32>
    %151 = vector.broadcast %145 : vector<1x256xf32> to vector<4x256xf32>
    %152 = arith.mulf %150, %151 : vector<4x256xf32>
    %153 = vector.shape_cast %152 : vector<4x256xf32> to vector<1x4x256xf32>
    %cst_37 = arith.constant dense<0.000000e+00> : vector<1xf32>
    %154 = vector.multi_reduction <add>, %153, %cst_37 [1, 2] : vector<1x4x256xf32> to vector<1xf32>
    %155 = vector.shape_cast %154 : vector<1xf32> to vector<1x1x1xf32>
    %156 = vector.extract %155[0, 0, 0] : f32 from vector<1x1x1xf32>
    %157 = arith.mulf %144, %144 : vector<8x256xf32>
    %c0_38 = arith.constant 0 : index
    %c0_39 = arith.constant 0 : index
    %158 = vector.load %arg9[%c0_38, %c0_39] : memref<8x1xf32, #tpu.memory_space<vmem>>, vector<8x1xf32>
    %159 = vector.broadcast %158 : vector<8x1xf32> to vector<8x256xf32>
    %160 = arith.mulf %157, %159 : vector<8x256xf32>
    %161 = vector.broadcast %146 : vector<1x256xf32> to vector<8x256xf32>
    %162 = arith.mulf %160, %161 : vector<8x256xf32>
    %163 = vector.shape_cast %162 : vector<8x256xf32> to vector<1x8x256xf32>
    %cst_40 = arith.constant dense<0.000000e+00> : vector<1xf32>
    %164 = vector.multi_reduction <add>, %163, %cst_40 [1, 2] : vector<1x8x256xf32> to vector<1xf32>
    %165 = vector.shape_cast %164 : vector<1xf32> to vector<1x1x1xf32>
    %166 = vector.extract %165[0, 0, 0] : f32 from vector<1x1x1xf32>
    %167 = arith.addf %156, %166 : f32
    %168 = vector.broadcast %56 : f32 to vector<1x8x128xf32>
    %c0_41 = arith.constant 0 : index
    %c0_42 = arith.constant 0 : index
    %c0_43 = arith.constant 0 : index
    %169 = vector.load %arg10[%c0_41, %c0_42, %c0_43] : memref<1x8x128xf32, #tpu.memory_space<vmem>>, vector<1x8x128xf32>
    tpu.vector_store %arg10[%c0_41, %c0_42, %c0_43], %168 {strides = array<i32>} : memref<1x8x128xf32, #tpu.memory_space<vmem>>, vector<1x8x128xf32>,
    %170 = vector.broadcast %13 : f32 to vector<1x8x128xf32>
    %c0_44 = arith.constant 0 : index
    %c0_45 = arith.constant 0 : index
    %c0_46 = arith.constant 0 : index
    %171 = vector.load %arg11[%c0_44, %c0_45, %c0_46] : memref<1x8x128xf32, #tpu.memory_space<vmem>>, vector<1x8x128xf32>
    tpu.vector_store %arg11[%c0_44, %c0_45, %c0_46], %170 {strides = array<i32>} : memref<1x8x128xf32, #tpu.memory_space<vmem>>, vector<1x8x128xf32>,
    %172 = vector.broadcast %167 : f32 to vector<1x8x128xf32>
    %c0_47 = arith.constant 0 : index
    %c0_48 = arith.constant 0 : index
    %c0_49 = arith.constant 0 : index
    %173 = vector.load %arg12[%c0_47, %c0_48, %c0_49] : memref<1x8x128xf32, #tpu.memory_space<vmem>>, vector<1x8x128xf32>
    tpu.vector_store %arg12[%c0_47, %c0_48, %c0_49], %172 {strides = array<i32>} : memref<1x8x128xf32, #tpu.memory_space<vmem>>, vector<1x8x128xf32>,
    return
  }
  func.func @transform_0(%arg0: i32) -> (i32, i32, i32) {
    %c0_i32 = arith.constant 0 : i32
    %c0_i32_0 = arith.constant 0 : i32
    %c0_i32_1 = arith.constant 0 : i32
    return %arg0, %c0_i32, %c0_i32_0 : i32, i32, i32
  }
  func.func @transform_1(%arg0: i32) -> (i32, i32) {
    %c0_i32 = arith.constant 0 : i32
    %c0_i32_0 = arith.constant 0 : i32
    %c0_i32_1 = arith.constant 0 : i32
    return %c0_i32, %c0_i32_0 : i32, i32
  }
  func.func @transform_2(%arg0: i32) -> (i32, i32) {
    %c0_i32 = arith.constant 0 : i32
    %c0_i32_0 = arith.constant 0 : i32
    %c0_i32_1 = arith.constant 0 : i32
    return %c0_i32, %c0_i32_0 : i32, i32
  }
  func.func @transform_3(%arg0: i32) -> (i32, i32) {
    %c0_i32 = arith.constant 0 : i32
    %c0_i32_0 = arith.constant 0 : i32
    %c0_i32_1 = arith.constant 0 : i32
    return %c0_i32, %c0_i32_0 : i32, i32
  }
  func.func @transform_4(%arg0: i32) -> (i32, i32) {
    %c0_i32 = arith.constant 0 : i32
    %c0_i32_0 = arith.constant 0 : i32
    %c0_i32_1 = arith.constant 0 : i32
    return %c0_i32, %c0_i32_0 : i32, i32
  }
  func.func @transform_5(%arg0: i32) -> (i32, i32) {
    %c0_i32 = arith.constant 0 : i32
    %c0_i32_0 = arith.constant 0 : i32
    %c0_i32_1 = arith.constant 0 : i32
    return %c0_i32, %c0_i32_0 : i32, i32
  }
  func.func @transform_6(%arg0: i32) -> (i32, i32) {
    %c0_i32 = arith.constant 0 : i32
    %c0_i32_0 = arith.constant 0 : i32
    %c0_i32_1 = arith.constant 0 : i32
    return %c0_i32, %c0_i32_0 : i32, i32
  }
  func.func @transform_7(%arg0: i32) -> (i32, i32) {
    %c0_i32 = arith.constant 0 : i32
    %c0_i32_0 = arith.constant 0 : i32
    %c0_i32_1 = arith.constant 0 : i32
    return %c0_i32, %c0_i32_0 : i32, i32
  }
  func.func @transform_8(%arg0: i32) -> (i32, i32) {
    %c0_i32 = arith.constant 0 : i32
    %c0_i32_0 = arith.constant 0 : i32
    %c0_i32_1 = arith.constant 0 : i32
    return %c0_i32, %c0_i32_0 : i32, i32
  }
  func.func @transform_9(%arg0: i32) -> (i32, i32, i32) {
    %c0_i32 = arith.constant 0 : i32
    %c0_i32_0 = arith.constant 0 : i32
    %c0_i32_1 = arith.constant 0 : i32
    return %arg0, %c0_i32, %c0_i32_0 : i32, i32, i32
  }
  func.func @transform_10(%arg0: i32) -> (i32, i32, i32) {
    %c0_i32 = arith.constant 0 : i32
    %c0_i32_0 = arith.constant 0 : i32
    %c0_i32_1 = arith.constant 0 : i32
    return %arg0, %c0_i32, %c0_i32_0 : i32, i32, i32
  }
  func.func @transform_11(%arg0: i32) -> (i32, i32, i32) {
    %c0_i32 = arith.constant 0 : i32
    %c0_i32_0 = arith.constant 0 : i32
    %c0_i32_1 = arith.constant 0 : i32
    return %arg0, %c0_i32, %c0_i32_0 : i32, i32, i32
  }
}

</mosaic_0001>

<llo_original>
// kernel: tpu_custom_call.1
$region0: #{tpu_custom_call.1}
  #allocation0 [shape = 'u32[]', space=smem, size = 0x4, offset = 0x4, fixed_abs, tag = 'smem constant byte address 0x4 - core index']
  #allocation1 [shape = 'u32[144,128]{1,0:T(1,128)}', space=vmem, size = 0x12000, scoped, tag = 'internal scratch']
  %s0 = inlined_call_operand.vmem [shape: f32[2,3,512], index: 0, kind: input, shape index: {}]
  %s1 = inlined_call_operand.vmem [shape: f32[256,36], index: 1, kind: input, shape index: {}]
  %s2 = inlined_call_operand.vmem [shape: f32[2,256], index: 2, kind: input, shape index: {}]
  %s3 = inlined_call_operand.vmem [shape: f32[4,27], index: 3, kind: input, shape index: {}]
  %s4 = inlined_call_operand.vmem [shape: f32[4,1], index: 4, kind: input, shape index: {}]
  %s5 = inlined_call_operand.vmem [shape: f32[8,36], index: 5, kind: input, shape index: {}]
  %s6 = inlined_call_operand.vmem [shape: f32[8,1], index: 6, kind: input, shape index: {}]
  %s7 = inlined_call_operand.vmem [shape: f32[4,1], index: 7, kind: input, shape index: {}]
  %s8 = inlined_call_operand.vmem [shape: f32[8,1], index: 8, kind: input, shape index: {}]
  %s9 = inlined_call_operand.hbm [shape: f32[2,8,128], index: 9, kind: output, shape index: {0}]
  %s10 = inlined_call_operand.hbm [shape: f32[2,8,128], index: 10, kind: output, shape index: {1}]
  %s11 = inlined_call_operand.hbm [shape: f32[2,8,128], index: 11, kind: output, shape index: {2}]
  %12 = xla_tuple %s9, %s10, %s11
  %s13 = sld [smem:[#allocation0]]
  $region85: #{tpu_custom_call.1} parent=0
    _
  %s15 = ssub.s32 1, %s13
  %s16 = scalar_select 0, %s15, %s13
  $region1: #{tpu_custom_call.1} parent=0
    #allocation2 [shape = 'u8[8192]{0}', space=vmem, size = 0x2000, scoped, tag = 'output window, operand 0']
    #allocation3 [shape = 's32[2]{0}', space=sflag, size = 0x8, scoped, tag = 'scoped memory for tpu_custom_call.1']
    #allocation4 [shape = 'u8[8192]{0}', space=vmem, size = 0x2000, scoped, tag = 'output window, operand 1']
    #allocation5 [shape = 's32[2]{0}', space=sflag, size = 0x8, scoped, tag = 'scoped memory for tpu_custom_call.1']
    #allocation6 [shape = 'u8[8192]{0}', space=vmem, size = 0x2000, scoped, tag = 'output window, operand 2']
    %17 = vsyncpa [#allocation3], 0
    %s18 = scalar_lea.sflag [#allocation3], 1
    %19 = vsyncpa %s18, 0
    %20 = vsyncpa [#allocation5], 0
    %s21 = scalar_lea.sflag [#allocation5], 1
    %22 = vsyncpa %s21, 0
    loop: start=0, step=1, limit=4
    $region2: #{tpu_custom_call.1} parent=1 // loop_pre_header
      _
    $region3: #{tpu_custom_call.1} parent=1 // loop_header
      %s24 = sphi 0, %s28
      %p25 = scmp.ge.s32.totalorder %s24, 4
      %s34 = sphi 0, %s36
      %s37 = sphi 0, %s34
      %s38 = sphi 0, %s37
      %s54 = sphi 0, %s38
      %s58 = sphi 0, %s58
      %s60 = sphi 0, %s58
      %s61 = sphi 0, %s60
      %s75 = sphi 0, %s61
      %s79 = sphi 0, %s79
      %s81 = sphi 0, %s79
      %s82 = sphi 0, %s81
      %s96 = sphi 0, %s82
      %s100 = sphi 0, %s100
      %s102 = sphi 0, %s100
      %s103 = sphi 0, %s102
      %s117 = sphi 0, %s103
      %s121 = sphi 0, %s121
      %s123 = sphi 0, %s121
      %s124 = sphi 0, %s123
      %s138 = sphi 0, %s124
      %s142 = sphi 0, %s142
      %s144 = sphi 0, %s142
      %s145 = sphi 0, %s144
      %s159 = sphi 0, %s145
      %s163 = sphi 0, %s163
      %s165 = sphi 0, %s163
      %s166 = sphi 0, %s165
      %s180 = sphi 0, %s166
      %s184 = sphi 0, %s184
      %s186 = sphi 0, %s184
      %s187 = sphi 0, %s186
      %s201 = sphi 0, %s187
      %s205 = sphi 0, %s205
      %s207 = sphi 0, %s205
      %s208 = sphi 0, %s207
      %s222 = sphi 0, %s208
      %s228 = sphi 0, %s230
      %s231 = sphi 0, %s228
      %s232 = sphi 0, %s231
      %s248 = sphi 0, %s232
      %s254 = sphi 0, %s256
      %s257 = sphi 0, %s254
      %s258 = sphi 0, %s257
      %s274 = sphi 0, %s258
      %s280 = sphi 0, %s282
      %s283 = sphi 0, %s280
      %s284 = sphi 0, %s283
      %s300 = sphi 0, %s284
    $region4: #{tpu_custom_call.1} parent=1 // loop_header_branch
      %27 = sbr.rel (%p25) target = $region8
    $region5: #{tpu_custom_call.1} parent=1 // loop_body
      %s29 = ssub.s32 %s24, 1
      %s30 = ssub.s32 %s24, 2
      %s31 = sadd.s32 %s24, 1
      %s32 = ssub.s32 %s24, %s31
      %p33 = scmp.eq.s32.totalorder %s32, 0
      %s35 = sadd.s32 %s34, 1
      %s36 = scalar_select %p33, %s34, %s35
      %p39 = pneg %p33
      %p40 = scmp.eq.s32.totalorder %s24, 1
      %p41 = por %p39, %p40
      %p42 = scmp.ne.s32.totalorder %s34, %s37
      %p43 = scmp.eq.s32.totalorder %s24, 0
      %p44 = por %p42, %p43
      %p45 = scmp.ne.s32.totalorder %s34, %s37
      %p46 = scmp.eq.s32.totalorder %s29, 1
      %p47 = por %p45, %p46
      %p48 = scmp.ne.s32.totalorder %s37, %s38
      %p49 = scmp.eq.s32.totalorder %s29, 0
      %p50 = por %p48, %p49
      %p51 = scmp.ne.s32.totalorder %s37, %s38
      %p52 = scmp.eq.s32.totalorder %s30, 1
      %p53 = por %p51, %p52
      %p55 = scmp.ne.s32.totalorder %s38, %s54
      %p56 = scmp.eq.s32.totalorder %s30, 0
      %p57 = por %p55, %p56
      %s59 = sadd.s32 %s58, 1
      %p62 = scmp.eq.s32.totalorder %s24, 1
      %p63 = scmp.ne.s32.totalorder %s58, %s60
      %p64 = scmp.eq.s32.totalorder %s24, 0
      %p65 = por %p63, %p64
      %p66 = scmp.ne.s32.totalorder %s58, %s60
      %p67 = scmp.eq.s32.totalorder %s29, 1
      %p68 = por %p66, %p67
      %p69 = scmp.ne.s32.totalorder %s60, %s61
      %p70 = scmp.eq.s32.totalorder %s29, 0
      %p71 = por %p69, %p70
      %p72 = scmp.ne.s32.totalorder %s60, %s61
      %p73 = scmp.eq.s32.totalorder %s30, 1
      %p74 = por %p72, %p73
      %p76 = scmp.ne.s32.totalorder %s61, %s75
      %p77 = scmp.eq.s32.totalorder %s30, 0
      %p78 = por %p76, %p77
      %s80 = sadd.s32 %s79, 1
      %p83 = scmp.eq.s32.totalorder %s24, 1
      %p84 = scmp.ne.s32.totalorder %s79, %s81
      %p85 = scmp.eq.s32.totalorder %s24, 0
      %p86 = por %p84, %p85
      %p87 = scmp.ne.s32.totalorder %s79, %s81
      %p88 = scmp.eq.s32.totalorder %s29, 1
      %p89 = por %p87, %p88
      %p90 = scmp.ne.s32.totalorder %s81, %s82
      %p91 = scmp.eq.s32.totalorder %s29, 0
      %p92 = por %p90, %p91
      %p93 = scmp.ne.s32.totalorder %s81, %s82
      %p94 = scmp.eq.s32.totalorder %s30, 1
      %p95 = por %p93, %p94
      %p97 = scmp.ne.s32.totalorder %s82, %s96
      %p98 = scmp.eq.s32.totalorder %s30, 0
      %p99 = por %p97, %p98
      %s101 = sadd.s32 %s100, 1
      %p104 = scmp.eq.s32.totalorder %s24, 1
      %p105 = scmp.ne.s32.totalorder %s100, %s102
      %p106 = scmp.eq.s32.totalorder %s24, 0
      %p107 = por %p105, %p106
      %p108 = scmp.ne.s32.totalorder %s100, %s102
      %p109 = scmp.eq.s32.totalorder %s29, 1
      %p110 = por %p108, %p109
      %p111 = scmp.ne.s32.totalorder %s102, %s103
      %p112 = scmp.eq.s32.totalorder %s29, 0
      %p113 = por %p111, %p112
      %p114 = scmp.ne.s32.totalorder %s102, %s103
      %p115 = scmp.eq.s32.totalorder %s30, 1
      %p116 = por %p114, %p115
      %p118 = scmp.ne.s32.totalorder %s103, %s117
      %p119 = scmp.eq.s32.totalorder %s30, 0
      %p120 = por %p118, %p119
      %s122 = sadd.s32 %s121, 1
      %p125 = scmp.eq.s32.totalorder %s24, 1
      %p126 = scmp.ne.s32.totalorder %s121, %s123
      %p127 = scmp.eq.s32.totalorder %s24, 0
      %p128 = por %p126, %p127
      %p129 = scmp.ne.s32.totalorder %s121, %s123
      %p130 = scmp.eq.s32.totalorder %s29, 1
      %p131 = por %p129, %p130
      %p132 = scmp.ne.s32.totalorder %s123, %s124
      %p133 = scmp.eq.s32.totalorder %s29, 0
      %p134 = por %p132, %p133
      %p135 = scmp.ne.s32.totalorder %s123, %s124
      %p136 = scmp.eq.s32.totalorder %s30, 1
      %p137 = por %p135, %p136
      %p139 = scmp.ne.s32.totalorder %s124, %s138
      %p140 = scmp.eq.s32.totalorder %s30, 0
      %p141 = por %p139, %p140
      %s143 = sadd.s32 %s142, 1
      %p146 = scmp.eq.s32.totalorder %s24, 1
      %p147 = scmp.ne.s32.totalorder %s142, %s144
      %p148 = scmp.eq.s32.totalorder %s24, 0
      %p149 = por %p147, %p148
      %p150 = scmp.ne.s32.totalorder %s142, %s144
      %p151 = scmp.eq.s32.totalorder %s29, 1
      %p152 = por %p150, %p151
      %p153 = scmp.ne.s32.totalorder %s144, %s145
      %p154 = scmp.eq.s32.totalorder %s29, 0
      %p155 = por %p153, %p154
      %p156 = scmp.ne.s32.totalorder %s144, %s145
      %p157 = scmp.eq.s32.totalorder %s30, 1
      %p158 = por %p156, %p157
      %p160 = scmp.ne.s32.totalorder %s145, %s159
      %p161 = scmp.eq.s32.totalorder %s30, 0
      %p162 = por %p160, %p161
      %s164 = sadd.s32 %s163, 1
      %p167 = scmp.eq.s32.totalorder %s24, 1
      %p168 = scmp.ne.s32.totalorder %s163, %s165
      %p169 = scmp.eq.s32.totalorder %s24, 0
      %p170 = por %p168, %p169
      %p171 = scmp.ne.s32.totalorder %s163, %s165
      %p172 = scmp.eq.s32.totalorder %s29, 1
      %p173 = por %p171, %p172
      %p174 = scmp.ne.s32.totalorder %s165, %s166
      %p175 = scmp.eq.s32.totalorder %s29, 0
      %p176 = por %p174, %p175
      %p177 = scmp.ne.s32.totalorder %s165, %s166
      %p178 = scmp.eq.s32.totalorder %s30, 1
      %p179 = por %p177, %p178
      %p181 = scmp.ne.s32.totalorder %s166, %s180
      %p182 = scmp.eq.s32.totalorder %s30, 0
      %p183 = por %p181, %p182
      %s185 = sadd.s32 %s184, 1
      %p188 = scmp.eq.s32.totalorder %s24, 1
      %p189 = scmp.ne.s32.totalorder %s184, %s186
      %p190 = scmp.eq.s32.totalorder %s24, 0
      %p191 = por %p189, %p190
      %p192 = scmp.ne.s32.totalorder %s184, %s186
      %p193 = scmp.eq.s32.totalorder %s29, 1
      %p194 = por %p192, %p193
      %p195 = scmp.ne.s32.totalorder %s186, %s187
      %p196 = scmp.eq.s32.totalorder %s29, 0
      %p197 = por %p195, %p196
      %p198 = scmp.ne.s32.totalorder %s186, %s187
      %p199 = scmp.eq.s32.totalorder %s30, 1
      %p200 = por %p198, %p199
      %p202 = scmp.ne.s32.totalorder %s187, %s201
      %p203 = scmp.eq.s32.totalorder %s30, 0
      %p204 = por %p202, %p203
      %s206 = sadd.s32 %s205, 1
      %p209 = scmp.eq.s32.totalorder %s24, 1
      %p210 = scmp.ne.s32.totalorder %s205, %s207
      %p211 = scmp.eq.s32.totalorder %s24, 0
      %p212 = por %p210, %p211
      %p213 = scmp.ne.s32.totalorder %s205, %s207
      %p214 = scmp.eq.s32.totalorder %s29, 1
      %p215 = por %p213, %p214
      %p216 = scmp.ne.s32.totalorder %s207, %s208
      %p217 = scmp.eq.s32.totalorder %s29, 0
      %p218 = por %p216, %p217
      %p219 = scmp.ne.s32.totalorder %s207, %s208
      %p220 = scmp.eq.s32.totalorder %s30, 1
      %p221 = por %p219, %p220
      %p223 = scmp.ne.s32.totalorder %s208, %s222
      %p224 = scmp.eq.s32.totalorder %s30, 0
      %p225 = por %p223, %p224
      %s226 = ssub.s32 %s24, %s31
      %p227 = scmp.eq.s32.totalorder %s226, 0
      %s229 = sadd.s32 %s228, 1
      %s230 = scalar_select %p227, %s228, %s229
      %p233 = pneg %p227
      %p234 = scmp.eq.s32.totalorder %s24, 1
      %p235 = por %p233, %p234
      %p236 = scmp.ne.s32.totalorder %s228, %s231
      %p237 = scmp.eq.s32.totalorder %s24, 0
      %p238 = por %p236, %p237
      %p239 = scmp.ne.s32.totalorder %s228, %s231
      %p240 = scmp.eq.s32.totalorder %s29, 1
      %p241 = por %p239, %p240
      %p242 = scmp.ne.s32.totalorder %s231, %s232
      %p243 = scmp.eq.s32.totalorder %s29, 0
      %p244 = por %p242, %p243
      %p245 = scmp.ne.s32.totalorder %s231, %s232
      %p246 = scmp.eq.s32.totalorder %s30, 1
      %p247 = por %p245, %p246
      %p249 = scmp.ne.s32.totalorder %s232, %s248
      %p250 = scmp.eq.s32.totalorder %s30, 0
      %p251 = por %p249, %p250
      %s252 = ssub.s32 %s24, %s31
      %p253 = scmp.eq.s32.totalorder %s252, 0
      %s255 = sadd.s32 %s254, 1
      %s256 = scalar_select %p253, %s254, %s255
      %p259 = pneg %p253
      %p260 = scmp.eq.s32.totalorder %s24, 1
      %p261 = por %p259, %p260
      %p262 = scmp.ne.s32.totalorder %s254, %s257
      %p263 = scmp.eq.s32.totalorder %s24, 0
      %p264 = por %p262, %p263
      %p265 = scmp.ne.s32.totalorder %s254, %s257
      %p266 = scmp.eq.s32.totalorder %s29, 1
      %p267 = por %p265, %p266
      %p268 = scmp.ne.s32.totalorder %s257, %s258
      %p269 = scmp.eq.s32.totalorder %s29, 0
      %p270 = por %p268, %p269
      %p271 = scmp.ne.s32.totalorder %s257, %s258
      %p272 = scmp.eq.s32.totalorder %s30, 1
      %p273 = por %p271, %p272
      %p275 = scmp.ne.s32.totalorder %s258, %s274
      %p276 = scmp.eq.s32.totalorder %s30, 0
      %p277 = por %p275, %p276
      %s278 = ssub.s32 %s24, %s31
      %p279 = scmp.eq.s32.totalorder %s278, 0
      %s281 = sadd.s32 %s280, 1
      %s282 = scalar_select %p279, %s280, %s281
      %p285 = pneg %p279
      %p286 = scmp.eq.s32.totalorder %s24, 1
      %p287 = por %p285, %p286
      %p288 = scmp.ne.s32.totalorder %s280, %s283
      %p289 = scmp.eq.s32.totalorder %s24, 0
      %p290 = por %p288, %p289
      %p291 = scmp.ne.s32.totalorder %s280, %s283
      %p292 = scmp.eq.s32.totalorder %s29, 1
      %p293 = por %p291, %p292
      %p294 = scmp.ne.s32.totalorder %s283, %s284
      %p295 = scmp.eq.s32.totalorder %s29, 0
      %p296 = por %p294, %p295
      %p297 = scmp.ne.s32.totalorder %s283, %s284
      %p298 = scmp.eq.s32.totalorder %s30, 1
      %p299 = por %p297, %p298
      %p301 = scmp.ne.s32.totalorder %s284, %s300
      %p302 = scmp.eq.s32.totalorder %s30, 0
      %p303 = por %p301, %p302
      %p304 = scmp.le.s32.totalorder 1, %s24
      %p305 = scmp.lt.s32.totalorder %s24, 3
      %p306 = pnand %p304, %p305
      %p307 = pneg %p306
      // Predicated region
      $region9: #{tpu_custom_call.1} parent=5 // pred_check
        _
      $region10: #{tpu_custom_call.1} parent=5 // pred_check_branch
        %309 = sbr.rel (%p306) target = $region12
      $region11: #{tpu_custom_call.1} parent=5 // pred_region
        %s310 = ssub.s32 %s24, 1
        // Predicated region
        $region13: #{tpu_custom_call.1} parent=11 // pred_check
          %p311 = pneg %p71
        $region14: #{tpu_custom_call.1} parent=11 // pred_check_branch
          %313 = sbr.rel (%p311) target = $region16
        $region15: #{tpu_custom_call.1} parent=11 // pred_region
          _
        $region16: #{tpu_custom_call.1} parent=11 // pred_fallthru
          _
        // Predicated region
        $region17: #{tpu_custom_call.1} parent=11 // pred_check
          %p314 = pneg %p92
        $region18: #{tpu_custom_call.1} parent=11 // pred_check_branch
          %316 = sbr.rel (%p314) target = $region20
        $region19: #{tpu_custom_call.1} parent=11 // pred_region
          _
        $region20: #{tpu_custom_call.1} parent=11 // pred_fallthru
          _
        // Predicated region
        $region21: #{tpu_custom_call.1} parent=11 // pred_check
          %p317 = pneg %p113
        $region22: #{tpu_custom_call.1} parent=11 // pred_check_branch
          %319 = sbr.rel (%p317) target = $region24
        $region23: #{tpu_custom_call.1} parent=11 // pred_region
          _
        $region24: #{tpu_custom_call.1} parent=11 // pred_fallthru
          _
        // Predicated region
        $region25: #{tpu_custom_call.1} parent=11 // pred_check
          %p320 = pneg %p134
        $region26: #{tpu_custom_call.1} parent=11 // pred_check_branch
          %322 = sbr.rel (%p320) target = $region28
        $region27: #{tpu_custom_call.1} parent=11 // pred_region
          _
        $region28: #{tpu_custom_call.1} parent=11 // pred_fallthru
          _
        // Predicated region
        $region29: #{tpu_custom_call.1} parent=11 // pred_check
          %p323 = pneg %p155
        $region30: #{tpu_custom_call.1} parent=11 // pred_check_branch
          %325 = sbr.rel (%p323) target = $region32
        $region31: #{tpu_custom_call.1} parent=11 // pred_region
          _
        $region32: #{tpu_custom_call.1} parent=11 // pred_fallthru
          _
        // Predicated region
        $region33: #{tpu_custom_call.1} parent=11 // pred_check
          %p326 = pneg %p176
        $region34: #{tpu_custom_call.1} parent=11 // pred_check_branch
          %328 = sbr.rel (%p326) target = $region36
        $region35: #{tpu_custom_call.1} parent=11 // pred_region
          _
        $region36: #{tpu_custom_call.1} parent=11 // pred_fallthru
          _
        // Predicated region
        $region37: #{tpu_custom_call.1} parent=11 // pred_check
          %p329 = pneg %p197
        $region38: #{tpu_custom_call.1} parent=11 // pred_check_branch
          %331 = sbr.rel (%p329) target = $region40
        $region39: #{tpu_custom_call.1} parent=11 // pred_region
          _
        $region40: #{tpu_custom_call.1} parent=11 // pred_fallthru
          _
        // Predicated region
        $region41: #{tpu_custom_call.1} parent=11 // pred_check
          %p332 = pneg %p218
        $region42: #{tpu_custom_call.1} parent=11 // pred_check_branch
          %334 = sbr.rel (%p332) target = $region44
        $region43: #{tpu_custom_call.1} parent=11 // pred_region
          _
        $region44: #{tpu_custom_call.1} parent=11 // pred_fallthru
          _
      $region12: #{tpu_custom_call.1} parent=5 // pred_fallthru
        _
      %p335 = scmp.lt.s32.totalorder %s24, 2
      // Predicated region
      $region45: #{tpu_custom_call.1} parent=5 // pred_check
        %p336 = pneg %p335
      $region46: #{tpu_custom_call.1} parent=5 // pred_check_branch
        %338 = sbr.rel (%p336) target = $region48
      $region47: #{tpu_custom_call.1} parent=5 // pred_region
        // Predicated region
        $region49: #{tpu_custom_call.1} parent=47 // pred_check
          %p339 = pneg %p44
        $region50: #{tpu_custom_call.1} parent=47 // pred_check_branch
          %341 = sbr.rel (%p339) target = $region52
        $region51: #{tpu_custom_call.1} parent=47 // pred_region
          %p342 = scmp.lt.s32.totalorder %s24, 1
          %s343 = scalar_select %p342, %s24, 1
          %s344 = smul.addr %s343, 4
          %s345 = smul.addr %s344, 4
          %s346 = scalar_lea.vmem %s0, %s345
        $region52: #{tpu_custom_call.1} parent=47 // pred_fallthru
          _
      $region48: #{tpu_custom_call.1} parent=5 // pred_fallthru
        _
      %p347 = scmp.le.s32.totalorder 1, %s24
      %p348 = scmp.lt.s32.totalorder %s24, 3
      %p349 = pnand %p347, %p348
      %p350 = pneg %p349
      // Predicated region
      $region53: #{tpu_custom_call.1} parent=5 // pred_check
        _
      $region54: #{tpu_custom_call.1} parent=5 // pred_check_branch
        %352 = sbr.rel (%p349) target = $region56
      $region55: #{tpu_custom_call.1} parent=5 // pred_region
        %s353 = ssub.s32 %s24, 1
        %p354 = scmp.lt.s32.totalorder %s29, 1
        %s355 = scalar_select %p354, %s29, 1
        %s356 = smul.addr %s355, 4
        %s357 = smul.addr %s356, 4
        %s358 = scalar_lea.vmem %s0, %s357
        %p359 = pneg %p50
        %p360 = pneg %p47
        %p361 = pneg %p71
        %p362 = pneg %p68
        %p363 = pneg %p92
        %p364 = pneg %p89
        %p365 = pneg %p113
        %p366 = pneg %p110
        %p367 = pneg %p134
        %p368 = pneg %p131
        %p369 = pneg %p155
        %p370 = pneg %p152
        %p371 = pneg %p176
        %p372 = pneg %p173
        %p373 = pneg %p197
        %p374 = pneg %p194
        %p375 = pneg %p218
        %p376 = pneg %p215
        %p377 = pneg %p244
        %p378 = pneg %p241
        %s379 = sand.u32 %s231, 1
        %s380 = scalar_lea.sflag [#allocation3], %s379
        %s381 = sand.u32 %s231, 1
        %s382 = smul.addr %s381, 8
        %s383 = scalar_lea.vmem [#allocation2], %s382
        %p384 = pneg %p270
        %p385 = pneg %p267
        %s386 = sand.u32 %s29, 1
        %s387 = scalar_lea.sflag [#allocation5], %s386
        %s388 = sand.u32 %s257, 1
        %s389 = smul.addr %s388, 8
        %s390 = scalar_lea.vmem [#allocation4], %s389
        %p391 = pneg %p296
        %p392 = pneg %p293
        %s393 = sand.u32 %s29, 1
        %s394 = scalar_lea.sflag [#allocation5], %s393
        %s395 = sand.u32 %s283, 1
        %s396 = smul.addr %s395, 8
        %s397 = scalar_lea.vmem [#allocation6], %s396
        %p398 = scmp.lt.s32.totalorder %s29, 1
        %s399 = scalar_select %p398, %s29, 1
        %s400 = smul.addr %s399, 4
        %s401 = smul.addr %s400, 4
        %s402 = scalar_lea.vmem %s0, %s401
        %v403 = vld [vmem:[%s402] sm:$0x77]
        %v404 = vld [vmem:[%s402 + $0x8] sm:$0x77]
        %v405 = vsub.f32 %v403, %v404
        %v406 = vmul.f32 %v405, %v405
        %v408 = vcombine.high %v406, %v406
        %vm410 = vcmask 1042432
        %v411 = vsel %vm410, %v406, 0.0
        %v412 = vsel %vm410, %v408, 0.0
        %v413 = vadd.f32 %v411, %v412
        %414 = vadd.xlane.f32.xlu0 %v413
        %v415 = vpop.xlane.xlu0 %414
        %v416 = vrot.slane %v415, 4
        %v417 = vadd.f32 %v415, %v416
        %v418 = vrot.slane %v417, 2
        %v419 = vadd.f32 %v417, %v418
        %v420 = vrot.slane %v419, 1
        %v421 = vadd.f32 %v419, %v420
        %s422 = vtos %v421
        %s423 = smul.f32 %s422, 0.0013020834
        %v424 = vstv %s423
        %v425 = vrcp.pop %v424
        %s426 = vtos %v425
        %v427 = vstv %s426
        %v428 = vlog2.pop %v427
        %v429 = vmul.f32 %v428, 0.6931472
        %s430 = vtos %v429
        %s431 = smul.f32 %s430, 4.3429446
        %v432 = vmul.f32 %v403, %v403
        %v433 = vmul.f32 %v404, %v404
        %v434 = vmul.f32 %v403, %v404
        %v436 = vcombine.high %v403, %v403
        %v439 = vcombine.high %v404, %v404
        %v440 = vrot.slane %v404, 5
        %v441 = vrot.slane %v439, 5
        %v445 = vcombine.high %v432, %v432
        %v446 = vrot.slane %v432, 2
        %v447 = vrot.slane %v445, 2
        %v451 = vcombine.high %v433, %v433
        %v452 = vrot.slane %v433, 7
        %v453 = vrot.slane %v451, 7
        %v457 = vcombine.low %v434, %v434
        %v459 = vsel %vm410, %v403, %v440
        %v460 = vsel %vm410, %v436, %v441
        %vm461 = vcmask 1045504
        %v462 = vsel %vm461, %v459, %v446
        %v463 = vsel %vm461, %v460, %v447
        %vm464 = vcmask 1040384
        %v465 = vsel %vm464, %v446, %v452
        %v466 = vsel %vm464, %v447, %v453
        %vm467 = vcmask 1043456
        %v468 = vsel %vm467, %v465, %v457
        %v469 = vsel %vm467, %v466, %v434
        %v470 = vld [vmem:[%s1] sm:$0xff]
        %v471 = vld [vmem:[%s1 + $0x8] sm:$0xff]
        %v472 = vld [vmem:[%s1 + $0x10] sm:$0xff]
        %v473 = vld [vmem:[%s1 + $0x18] sm:$0xff]
        %v474 = vld [vmem:[%s1 + $0x20] sm:$0xff]
        %v475 = vld [vmem:[%s1 + $0x28] sm:$0xff]
        %v476 = vld [vmem:[%s1 + $0x30] sm:$0xff]
        %v477 = vld [vmem:[%s1 + $0x38] sm:$0xff]
        %v478 = vld [vmem:[%s1 + $0x40] sm:$0xff]
        %v479 = vld [vmem:[%s1 + $0x48] sm:$0xff]
        %v480 = vld [vmem:[%s1 + $0x50] sm:$0xff]
        %v481 = vld [vmem:[%s1 + $0x58] sm:$0xff]
        %v482 = vld [vmem:[%s1 + $0x60] sm:$0xff]
        %v483 = vld [vmem:[%s1 + $0x68] sm:$0xff]
        %v484 = vld [vmem:[%s1 + $0x70] sm:$0xff]
        %v485 = vld [vmem:[%s1 + $0x78] sm:$0xff]
        %v486 = vld [vmem:[%s1 + $0x80] sm:$0xff]
        %v487 = vld [vmem:[%s1 + $0x88] sm:$0xff]
        %v488 = vld [vmem:[%s1 + $0x90] sm:$0xff]
        %v489 = vld [vmem:[%s1 + $0x98] sm:$0xff]
        %v490 = vld [vmem:[%s1 + $0xa0] sm:$0xff]
        %v491 = vld [vmem:[%s1 + $0xa8] sm:$0xff]
        %v492 = vld [vmem:[%s1 + $0xb0] sm:$0xff]
        %v493 = vld [vmem:[%s1 + $0xb8] sm:$0xff]
        %v494 = vld [vmem:[%s1 + $0xc0] sm:$0xff]
        %v495 = vld [vmem:[%s1 + $0xc8] sm:$0xff]
        %v496 = vld [vmem:[%s1 + $0xd0] sm:$0xff]
        %v497 = vld [vmem:[%s1 + $0xd8] sm:$0xff]
        %v498 = vld [vmem:[%s1 + $0xe0] sm:$0xff]
        %v499 = vld [vmem:[%s1 + $0xe8] sm:$0xff]
        %v500 = vld [vmem:[%s1 + $0xf0] sm:$0xff]
        %v501 = vld [vmem:[%s1 + $0xf8] sm:$0xff]
        %502 = vmatprep.subr.mxu0 0.0
        %503 = vmatpush1.msra.mxu0 %v470
        %504 = vmatprep.subr.mxu0 0.0
        %505 = vmatpush1.msra.mxu0 %v471
        %506 = vmatprep.subr.mxu0 0.0
        %507 = vmatpush1.msra.mxu0 %v472
        %508 = vmatprep.subr.mxu0 0.0
        %509 = vmatpush1.msra.mxu0 %v473
        %510 = vmatprep.subr.mxu0 0.0
        %511 = vmatpush1.msra.mxu0 %v474
        %512 = vmatprep.subr.mxu0 0.0
        %513 = vmatpush1.msra.mxu0 %v475
        %514 = vmatprep.subr.mxu0 0.0
        %515 = vmatpush1.msra.mxu0 %v476
        %516 = vmatprep.subr.mxu0 0.0
        %517 = vmatpush1.msra.mxu0 %v477
        %518 = vmatprep.subr.mxu0 0.0
        %519 = vmatpush1.msra.mxu0 %v478
        %520 = vmatprep.subr.mxu0 0.0
        %521 = vmatpush1.msra.mxu0 %v479
        %522 = vmatprep.subr.mxu0 0.0
        %523 = vmatpush1.msra.mxu0 %v480
        %524 = vmatprep.subr.mxu0 0.0
        %525 = vmatpush1.msra.mxu0 %v481
        %526 = vmatprep.subr.mxu0 0.0
        %527 = vmatpush1.msra.mxu0 %v482
        %528 = vmatprep.subr.mxu0 0.0
        %529 = vmatpush1.msra.mxu0 %v483
        %530 = vmatprep.subr.mxu0 0.0
        %531 = vmatpush1.msra.mxu0 %v484
        %532 = vmatprep.subr.mxu0 0.0
        %533 = vmatpush1.msra.mxu0 %v485
        %534 = vmatprep.subr.mxu0 0.0
        %535 = vmatpush1.msra.mxu0 %v486
        %536 = vmatprep.subr.mxu0 0.0
        %537 = vmatpush1.msra.mxu0 %v487
        %538 = vmatprep.subr.mxu0 0.0
        %539 = vmatpush1.msra.mxu0 %v488
        %540 = vmatprep.subr.mxu0 0.0
        %541 = vmatpush1.msra.mxu0 %v489
        %542 = vmatprep.subr.mxu0 0.0
        %543 = vmatpush1.msra.mxu0 %v490
        %544 = vmatprep.subr.mxu0 0.0
        %545 = vmatpush1.msra.mxu0 %v491
        %546 = vmatprep.subr.mxu0 0.0
        %547 = vmatpush1.msra.mxu0 %v492
        %548 = vmatprep.subr.mxu0 0.0
        %549 = vmatpush1.msra.mxu0 %v493
        %550 = vmatprep.subr.mxu0 0.0
        %551 = vmatpush1.msra.mxu0 %v494
        %552 = vmatprep.subr.mxu0 0.0
        %553 = vmatpush1.msra.mxu0 %v495
        %554 = vmatprep.subr.mxu0 0.0
        %555 = vmatpush1.msra.mxu0 %v496
        %556 = vmatprep.subr.mxu0 0.0
        %557 = vmatpush1.msra.mxu0 %v497
        %558 = vmatprep.subr.mxu0 0.0
        %559 = vmatpush1.msra.mxu0 %v498
        %560 = vmatprep.subr.mxu0 0.0
        %561 = vmatpush1.msra.mxu0 %v499
        %562 = vmatprep.subr.mxu0 0.0
        %563 = vmatpush1.msra.mxu0 %v500
        %564 = vmatprep.subr.mxu0 0.0
        %565 = vmatpush1.msra.mxu0 %v501
        %566 = vmatprep.mubr.f32.mxu0 %v463
        %567 = vmatmul.mubr.f32.gmra.mrb[0].mxu0 %v462
        %v568 = vpop.f32.mrb[0].mxu0
        %v569 = vadd.f32 0.0, %v568
        %v570 = vpop.f32.mrb[0].mxu0
        %571 = vmatprep.mubr.f32.mxu0 %v469
        %572 = vmatmul.mubr.f32.gmra.mrb[0].mxu0 %v468
        %v573 = vpop.f32.mrb[0].mxu0
        %v574 = vadd.f32 0.0, %v573
        %v575 = vpop.f32.mrb[0].mxu0
        %576 = vdwg.mxu0
        %v577 = vmul.f32 %v569, %v569
        %v579 = vrot.slane %v577, 2
        %v581 = vsub.f32 %v569, %v579
        %v582 = vsub.f32 %v574, %v579
        %v584 = vrot.slane %v569, 3
        %v586 = vmul.f32 %v569, %v584
        %v588 = vrot.slane %v586, 4
        %v590 = vsub.f32 %v574, %v588
        %v591 = vmul.f32 %v569, 2.0
        %v592 = vmul.f32 %v591, %v584
        %v593 = vadd.f32 %v592, 0.0001
        %v594 = vmul.f32 %v590, 2.0
        %v595 = vadd.f32 %v594, 0.0009
        %v597 = vrot.slane %v595, 4
        %v599 = vmul.f32 %v593, %v597
        %v600 = vrot.slane %v577, 3
        %v602 = vadd.f32 %v577, %v600
        %v603 = vadd.f32 %v602, 0.0001
        %v605 = vrot.slane %v582, 3
        %v607 = vadd.f32 %v581, %v605
        %v608 = vadd.f32 %v582, %v605
        %v609 = vadd.f32 %v607, 0.0009
        %v610 = vadd.f32 %v608, 0.0009
        %vm613 = vcmask 1041408
        %v614 = vrot.slane %v609, 6
        %v615 = vrot.slane %v610, 6
        %v616 = vsel %vm613, %v614, %v615
        %v618 = vmul.f32 %v603, %v616
        %v619 = vrcp.pop %v618
        %v620 = vmul.f32 %v599, %v619
        %vm621 = vcmask 288768
        %v622 = vsel %vm621, %v620, 0.0
        %623 = vadd.xlane.f32.xlu0 %v622
        %v624 = vpop.xlane.xlu0 %623
        %v625 = vrot.slane %v624, 4
        %v626 = vadd.f32 %v624, %v625
        %v627 = vrot.slane %v626, 2
        %v628 = vadd.f32 %v626, %v627
        %v629 = vrot.slane %v628, 1
        %v630 = vadd.f32 %v628, %v629
        %s631 = vtos %v630
        %v632 = vrcp.pop 108.0
        %s633 = vtos %v632
        %s634 = smul.f32 %s631, %s633
        %635 = vrot.lane.b32.xlu0 %v403, 127
        %v636 = vpop.permute.xlu0 %635
        %637 = vrot.lane.b32.xlu0 %v436, 127
        %v638 = vpop.permute.xlu0 %637
        %639 = vrot.lane.b32.xlu0 %v404, 127
        %v640 = vpop.permute.xlu0 %639
        %641 = vrot.lane.b32.xlu0 %v439, 127
        %v642 = vpop.permute.xlu0 %641
        %vm643 = vcmask 1039360
        %v644 = vsel %vm643, %v636, %v638
        %v645 = vsel %vm643, %v638, %v640
        %v646 = vsel %vm643, %v640, %v642
        %v649 = vsel %vm643, %v642, %v636
        %650 = vrot.lane.b32.xlu0 %v403, 126
        %v651 = vpop.permute.xlu0 %650
        %652 = vrot.lane.b32.xlu0 %v436, 126
        %v653 = vpop.permute.xlu0 %652
        %654 = vrot.lane.b32.xlu0 %v404, 126
        %v655 = vpop.permute.xlu0 %654
        %656 = vrot.lane.b32.xlu0 %v439, 126
        %v657 = vpop.permute.xlu0 %656
        %vm658 = vcmask 1031168
        %v659 = vsel %vm658, %v651, %v653
        %v660 = vsel %vm658, %v653, %v655
        %v661 = vsel %vm658, %v655, %v657
        %v664 = vsel %vm658, %v657, %v651
        %665 = vrot.lane.b32.xlu0 %v403, 112
        %v666 = vpop.permute.xlu0 %665
        %667 = vrot.lane.b32.xlu0 %v436, 112
        %v668 = vpop.permute.xlu0 %667
        %669 = vrot.lane.b32.xlu0 %v404, 112
        %v670 = vpop.permute.xlu0 %669
        %671 = vrot.lane.b32.xlu0 %v439, 112
        %v672 = vpop.permute.xlu0 %671
        %vm673 = vcmask 916480
        %v674 = vsel %vm673, %v666, %v668
        %v675 = vsel %vm673, %v668, %v670
        %v676 = vsel %vm673, %v670, %v672
        %v679 = vsel %vm673, %v672, %v666
        %680 = vrot.lane.b32.xlu0 %v403, 111
        %v681 = vpop.permute.xlu0 %680
        %682 = vrot.lane.b32.xlu0 %v436, 111
        %v683 = vpop.permute.xlu0 %682
        %684 = vrot.lane.b32.xlu0 %v404, 111
        %v685 = vpop.permute.xlu0 %684
        %686 = vrot.lane.b32.xlu0 %v439, 111
        %v687 = vpop.permute.xlu0 %686
        %vm688 = vcmask 908288
        %v689 = vsel %vm688, %v681, %v683
        %v690 = vsel %vm688, %v683, %v685
        %v691 = vsel %vm688, %v685, %v687
        %v694 = vsel %vm688, %v687, %v681
        %695 = vrot.lane.b32.xlu0 %v403, 110
        %v696 = vpop.permute.xlu0 %695
        %697 = vrot.lane.b32.xlu0 %v436, 110
        %v698 = vpop.permute.xlu0 %697
        %699 = vrot.lane.b32.xlu0 %v404, 110
        %v700 = vpop.permute.xlu0 %699
        %701 = vrot.lane.b32.xlu0 %v439, 110
        %v702 = vpop.permute.xlu0 %701
        %vm703 = vcmask 900096
        %v704 = vsel %vm703, %v696, %v698
        %v705 = vsel %vm703, %v698, %v700
        %v706 = vsel %vm703, %v700, %v702
        %v709 = vsel %vm703, %v702, %v696
        %710 = vrot.lane.b32.xlu0 %v403, 96
        %v711 = vpop.permute.xlu0 %710
        %712 = vrot.lane.b32.xlu0 %v436, 96
        %v713 = vpop.permute.xlu0 %712
        %714 = vrot.lane.b32.xlu0 %v404, 96
        %v715 = vpop.permute.xlu0 %714
        %716 = vrot.lane.b32.xlu0 %v439, 96
        %v717 = vpop.permute.xlu0 %716
        %vm718 = vcmask 785408
        %v719 = vsel %vm718, %v711, %v713
        %v720 = vsel %vm718, %v713, %v715
        %v721 = vsel %vm718, %v715, %v717
        %v724 = vsel %vm718, %v717, %v711
        %725 = vrot.lane.b32.xlu0 %v403, 95
        %v726 = vpop.permute.xlu0 %725
        %727 = vrot.lane.b32.xlu0 %v436, 95
        %v728 = vpop.permute.xlu0 %727
        %729 = vrot.lane.b32.xlu0 %v404, 95
        %v730 = vpop.permute.xlu0 %729
        %731 = vrot.lane.b32.xlu0 %v439, 95
        %v732 = vpop.permute.xlu0 %731
        %vm733 = vcmask 777216
        %v734 = vsel %vm733, %v726, %v728
        %v735 = vsel %vm733, %v728, %v730
        %v736 = vsel %vm733, %v730, %v732
        %v739 = vsel %vm733, %v732, %v726
        %740 = vrot.lane.b32.xlu0 %v403, 94
        %v741 = vpop.permute.xlu0 %740
        %742 = vrot.lane.b32.xlu0 %v436, 94
        %v743 = vpop.permute.xlu0 %742
        %744 = vrot.lane.b32.xlu0 %v404, 94
        %v745 = vpop.permute.xlu0 %744
        %746 = vrot.lane.b32.xlu0 %v439, 94
        %v747 = vpop.permute.xlu0 %746
        %vm748 = vcmask 769024
        %v749 = vsel %vm748, %v741, %v743
        %v750 = vsel %vm748, %v743, %v745
        %v751 = vsel %vm748, %v745, %v747
        %v754 = vsel %vm748, %v747, %v741
        %v757 = vrot.slane %v644, 5
        %v758 = vrot.slane %v645, 5
        %v759 = vrot.slane %v646, 5
        %v760 = vrot.slane %v649, 5
        %v766 = vrot.slane %v659, 2
        %v767 = vrot.slane %v660, 2
        %v768 = vrot.slane %v661, 2
        %v769 = vrot.slane %v664, 2
        %v775 = vrot.slane %v674, 7
        %v776 = vrot.slane %v675, 7
        %v777 = vrot.slane %v676, 7
        %v778 = vrot.slane %v679, 7
        %v784 = vrot.slane %v689, 4
        %v785 = vrot.slane %v690, 4
        %v786 = vrot.slane %v691, 4
        %v787 = vrot.slane %v694, 4
        %v793 = vrot.slane %v704, 1
        %v794 = vrot.slane %v705, 1
        %v795 = vrot.slane %v706, 1
        %v796 = vrot.slane %v709, 1
        %v802 = vrot.slane %v719, 6
        %v803 = vrot.slane %v720, 6
        %v804 = vrot.slane %v721, 6
        %v805 = vrot.slane %v724, 6
        %v811 = vrot.slane %v734, 3
        %v812 = vrot.slane %v735, 3
        %v813 = vrot.slane %v736, 3
        %v814 = vrot.slane %v739, 3
        %v819 = vsel %vm410, %v403, %v757
        %v820 = vsel %vm410, %v436, %v758
        %v821 = vsel %vm410, %v404, %v759
        %v822 = vsel %vm410, %v439, %v760
        %v823 = vsel %vm461, %v819, %v766
        %v824 = vsel %vm461, %v820, %v767
        %v825 = vsel %vm461, %v821, %v768
        %v826 = vsel %vm461, %v822, %v769
        %v827 = vsel %vm464, %v766, %v775
        %v828 = vsel %vm464, %v767, %v776
        %v829 = vsel %vm464, %v768, %v777
        %v830 = vsel %vm464, %v769, %v778
        %v831 = vsel %vm467, %v827, %v784
        %v832 = vsel %vm467, %v828, %v785
        %v833 = vsel %vm467, %v829, %v786
        %v834 = vsel %vm467, %v830, %v787
        %vm835 = vcmask 1046528
        %v836 = vsel %vm835, %v831, %v793
        %v837 = vsel %vm835, %v832, %v794
        %v838 = vsel %vm835, %v833, %v795
        %v839 = vsel %vm835, %v834, %v796
        %v840 = vsel %vm613, %v793, %v802
        %v841 = vsel %vm613, %v794, %v803
        %v842 = vsel %vm613, %v795, %v804
        %v843 = vsel %vm613, %v796, %v805
        %vm844 = vcmask 1044480
        %v845 = vsel %vm844, %v840, %v811
        %v846 = vsel %vm844, %v841, %v812
        %v847 = vsel %vm844, %v842, %v813
        %v848 = vsel %vm844, %v843, %v814
        %v849 = vld [vmem:[%s3] sm:$0xf]
        %v850 = vld [vmem:[%s4] sm:$0xf]
        %852 = vset.pattern.permute.xlu0 0
        %853 = vperm.xlu0 %852, %v850
        %v854 = vpop.permute.xlu0 %853
        %vm856 = vcmask 220160
        %v858 = vsel %vm856, %v849, 0
        %v860 = vsel %vm410, %v749, 0
        %v862 = vsel %vm410, %v750, 0
        %v864 = vsel %vm410, %v751, 0
        %v867 = vsel %vm410, %v754, 0
        %869 = vmatprep.subr.mxu0 %v824
        %870 = vmatpush1.msra.mxu0 %v823
        %871 = vmatprep.subr.mxu0 %v837
        %872 = vmatpush1.msra.mxu0 %v836
        %873 = vmatprep.subr.mxu0 %v846
        %874 = vmatpush1.msra.mxu0 %v845
        %875 = vmatprep.subr.mxu0 %v862
        %876 = vmatpush1.msra.mxu0 %v860
        %877 = vmatprep.subr.mxu0 0.0
        %878 = vmatpush1.msra.mxu0 0.0
        %879 = vmatprep.subr.mxu0 0.0
        %880 = vmatpush1.msra.mxu0 0.0
        %881 = vmatprep.subr.mxu0 0.0
        %882 = vmatpush1.msra.mxu0 0.0
        %883 = vmatprep.subr.mxu0 0.0
        %884 = vmatpush1.msra.mxu0 0.0
        %885 = vmatprep.subr.mxu0 0.0
        %886 = vmatpush1.msra.mxu0 0.0
        %887 = vmatprep.subr.mxu0 0.0
        %888 = vmatpush1.msra.mxu0 0.0
        %889 = vmatprep.subr.mxu0 0.0
        %890 = vmatpush1.msra.mxu0 0.0
        %891 = vmatprep.subr.mxu0 0.0
        %892 = vmatpush1.msra.mxu0 0.0
        %893 = vmatprep.subr.mxu0 0.0
        %894 = vmatpush1.msra.mxu0 0.0
        %895 = vmatprep.subr.mxu0 0.0
        %896 = vmatpush1.msra.mxu0 0.0
        %897 = vmatprep.subr.mxu0 0.0
        %898 = vmatpush1.msra.mxu0 0.0
        %899 = vmatprep.subr.mxu0 0.0
        %900 = vmatpush1.msra.mxu0 0.0
        %901 = vmatprep.subr.mxu0 0.0
        %902 = vmatpush1.msra.mxu0 0.0
        %903 = vmatprep.subr.mxu0 0.0
        %904 = vmatpush1.msra.mxu0 0.0
        %905 = vmatprep.subr.mxu0 0.0
        %906 = vmatpush1.msra.mxu0 0.0
        %907 = vmatprep.subr.mxu0 0.0
        %908 = vmatpush1.msra.mxu0 0.0
        %909 = vmatprep.subr.mxu0 0.0
        %910 = vmatpush1.msra.mxu0 0.0
        %911 = vmatprep.subr.mxu0 0.0
        %912 = vmatpush1.msra.mxu0 0.0
        %913 = vmatprep.subr.mxu0 0.0
        %914 = vmatpush1.msra.mxu0 0.0
        %915 = vmatprep.subr.mxu0 0.0
        %916 = vmatpush1.msra.mxu0 0.0
        %917 = vmatprep.subr.mxu0 0.0
        %918 = vmatpush1.msra.mxu0 0.0
        %919 = vmatprep.subr.mxu0 0.0
        %920 = vmatpush1.msra.mxu0 0.0
        %921 = vmatprep.subr.mxu0 0.0
        %922 = vmatpush1.msra.mxu0 0.0
        %923 = vmatprep.subr.mxu0 0.0
        %924 = vmatpush1.msra.mxu0 0.0
        %925 = vmatprep.subr.mxu0 0.0
        %926 = vmatpush1.msra.mxu0 0.0
        %927 = vmatprep.subr.mxu0 0.0
        %928 = vmatpush1.msra.mxu0 0.0
        %929 = vmatprep.subr.mxu0 0.0
        %930 = vmatpush1.msra.mxu0 0.0
        %931 = vmatprep.subr.mxu0 0.0
        %932 = vmatpush1.msra.mxu0 0.0
        %933 = vmatprep.mubr.f32.mxu0 0.0
        %934 = vmatmul.mubr.f32.gmra.mrb[0].mxu0 %v858
        %v935 = vpop.f32.mrb[0].mxu0
        %v936 = vadd.f32 %v854, %v935
        %v937 = vpop.f32.mrb[0].mxu0
        %v938 = vadd.f32 %v854, %v937
        %939 = vdwg.mxu0
        %940 = vmatprep.subr.mxu0 %v826
        %941 = vmatpush1.msra.mxu0 %v825
        %942 = vmatprep.subr.mxu0 %v839
        %943 = vmatpush1.msra.mxu0 %v838
        %944 = vmatprep.subr.mxu0 %v848
        %945 = vmatpush1.msra.mxu0 %v847
        %946 = vmatprep.subr.mxu0 %v867
        %947 = vmatpush1.msra.mxu0 %v864
        %948 = vmatprep.subr.mxu0 0.0
        %949 = vmatpush1.msra.mxu0 0.0
        %950 = vmatprep.subr.mxu0 0.0
        %951 = vmatpush1.msra.mxu0 0.0
        %952 = vmatprep.subr.mxu0 0.0
        %953 = vmatpush1.msra.mxu0 0.0
        %954 = vmatprep.subr.mxu0 0.0
        %955 = vmatpush1.msra.mxu0 0.0
        %956 = vmatprep.subr.mxu0 0.0
        %957 = vmatpush1.msra.mxu0 0.0
        %958 = vmatprep.subr.mxu0 0.0
        %959 = vmatpush1.msra.mxu0 0.0
        %960 = vmatprep.subr.mxu0 0.0
        %961 = vmatpush1.msra.mxu0 0.0
        %962 = vmatprep.subr.mxu0 0.0
        %963 = vmatpush1.msra.mxu0 0.0
        %964 = vmatprep.subr.mxu0 0.0
        %965 = vmatpush1.msra.mxu0 0.0
        %966 = vmatprep.subr.mxu0 0.0
        %967 = vmatpush1.msra.mxu0 0.0
        %968 = vmatprep.subr.mxu0 0.0
        %969 = vmatpush1.msra.mxu0 0.0
        %970 = vmatprep.subr.mxu0 0.0
        %971 = vmatpush1.msra.mxu0 0.0
        %972 = vmatprep.subr.mxu0 0.0
        %973 = vmatpush1.msra.mxu0 0.0
        %974 = vmatprep.subr.mxu0 0.0
        %975 = vmatpush1.msra.mxu0 0.0
        %976 = vmatprep.subr.mxu0 0.0
        %977 = vmatpush1.msra.mxu0 0.0
        %978 = vmatprep.subr.mxu0 0.0
        %979 = vmatpush1.msra.mxu0 0.0
        %980 = vmatprep.subr.mxu0 0.0
        %981 = vmatpush1.msra.mxu0 0.0
        %982 = vmatprep.subr.mxu0 0.0
        %983 = vmatpush1.msra.mxu0 0.0
        %984 = vmatprep.subr.mxu0 0.0
        %985 = vmatpush1.msra.mxu0 0.0
        %986 = vmatprep.subr.mxu0 0.0
        %987 = vmatpush1.msra.mxu0 0.0
        %988 = vmatprep.subr.mxu0 0.0
        %989 = vmatpush1.msra.mxu0 0.0
        %990 = vmatprep.subr.mxu0 0.0
        %991 = vmatpush1.msra.mxu0 0.0
        %992 = vmatprep.subr.mxu0 0.0
        %993 = vmatpush1.msra.mxu0 0.0
        %994 = vmatprep.subr.mxu0 0.0
        %995 = vmatpush1.msra.mxu0 0.0
        %996 = vmatprep.subr.mxu0 0.0
        %997 = vmatpush1.msra.mxu0 0.0
        %998 = vmatprep.subr.mxu0 0.0
        %999 = vmatpush1.msra.mxu0 0.0
        %1000 = vmatprep.subr.mxu0 0.0
        %1001 = vmatpush1.msra.mxu0 0.0
        %1002 = vmatprep.subr.mxu0 0.0
        %1003 = vmatpush1.msra.mxu0 0.0
        %1004 = vmatprep.mubr.f32.mxu0 0.0
        %1005 = vmatmul.mubr.f32.gmra.mrb[0].mxu0 %v858
        %v1006 = vpop.f32.mrb[0].mxu0
        %v1007 = vadd.f32 %v854, %v1006
        %v1008 = vpop.f32.mrb[0].mxu0
        %v1009 = vadd.f32 %v854, %v1008
        %1010 = vdwg.mxu0
        %v1011 = vmax.f32 %v936, 0.0
        %v1012 = vmax.f32 %v938, 0.0
        %v1013 = vmax.f32 %v1007, 0.0
        %v1014 = vmax.f32 %v1009, 0.0
        %1019 = vrot.lane.b32.xlu0 %v1011, 127
        %v1020 = vpop.permute.xlu0 %1019
        %1021 = vrot.lane.b32.xlu0 %v1012, 127
        %v1022 = vpop.permute.xlu0 %1021
        %1023 = vrot.lane.b32.xlu0 %v1013, 127
        %v1024 = vpop.permute.xlu0 %1023
        %1025 = vrot.lane.b32.xlu0 %v1014, 127
        %v1026 = vpop.permute.xlu0 %1025
        %v1027 = vsel %vm643, %v1020, %v1022
        %v1028 = vsel %vm643, %v1022, %v1024
        %v1029 = vsel %vm643, %v1024, %v1026
        %v1032 = vsel %vm643, %v1026, %v1020
        %1033 = vrot.lane.b32.xlu0 %v1011, 126
        %v1034 = vpop.permute.xlu0 %1033
        %1035 = vrot.lane.b32.xlu0 %v1012, 126
        %v1036 = vpop.permute.xlu0 %1035
        %1037 = vrot.lane.b32.xlu0 %v1013, 126
        %v1038 = vpop.permute.xlu0 %1037
        %1039 = vrot.lane.b32.xlu0 %v1014, 126
        %v1040 = vpop.permute.xlu0 %1039
        %v1041 = vsel %vm658, %v1034, %v1036
        %v1042 = vsel %vm658, %v1036, %v1038
        %v1043 = vsel %vm658, %v1038, %v1040
        %v1049 = vsel %vm658, %v1040, %v1034
        %1050 = vrot.lane.b32.xlu0 %v1011, 112
        %v1051 = vpop.permute.xlu0 %1050
        %1052 = vrot.lane.b32.xlu0 %v1012, 112
        %v1053 = vpop.permute.xlu0 %1052
        %1054 = vrot.lane.b32.xlu0 %v1013, 112
        %v1055 = vpop.permute.xlu0 %1054
        %1056 = vrot.lane.b32.xlu0 %v1014, 112
        %v1057 = vpop.permute.xlu0 %1056
        %v1058 = vsel %vm673, %v1051, %v1053
        %v1059 = vsel %vm673, %v1053, %v1055
        %v1060 = vsel %vm673, %v1055, %v1057
        %v1063 = vsel %vm673, %v1057, %v1051
        %1064 = vrot.lane.b32.xlu0 %v1011, 111
        %v1065 = vpop.permute.xlu0 %1064
        %1066 = vrot.lane.b32.xlu0 %v1012, 111
        %v1067 = vpop.permute.xlu0 %1066
        %1068 = vrot.lane.b32.xlu0 %v1013, 111
        %v1069 = vpop.permute.xlu0 %1068
        %1070 = vrot.lane.b32.xlu0 %v1014, 111
        %v1071 = vpop.permute.xlu0 %1070
        %v1072 = vsel %vm688, %v1065, %v1067
        %v1073 = vsel %vm688, %v1067, %v1069
        %v1074 = vsel %vm688, %v1069, %v1071
        %v1080 = vsel %vm688, %v1071, %v1065
        %1081 = vrot.lane.b32.xlu0 %v1011, 110
        %v1082 = vpop.permute.xlu0 %1081
        %1083 = vrot.lane.b32.xlu0 %v1012, 110
        %v1084 = vpop.permute.xlu0 %1083
        %1085 = vrot.lane.b32.xlu0 %v1013, 110
        %v1086 = vpop.permute.xlu0 %1085
        %1087 = vrot.lane.b32.xlu0 %v1014, 110
        %v1088 = vpop.permute.xlu0 %1087
        %v1089 = vsel %vm703, %v1082, %v1084
        %v1090 = vsel %vm703, %v1084, %v1086
        %v1091 = vsel %vm703, %v1086, %v1088
        %v1094 = vsel %vm703, %v1088, %v1082
        %1095 = vrot.lane.b32.xlu0 %v1011, 96
        %v1096 = vpop.permute.xlu0 %1095
        %1097 = vrot.lane.b32.xlu0 %v1012, 96
        %v1098 = vpop.permute.xlu0 %1097
        %1099 = vrot.lane.b32.xlu0 %v1013, 96
        %v1100 = vpop.permute.xlu0 %1099
        %1101 = vrot.lane.b32.xlu0 %v1014, 96
        %v1102 = vpop.permute.xlu0 %1101
        %v1103 = vsel %vm718, %v1096, %v1098
        %v1104 = vsel %vm718, %v1098, %v1100
        %v1105 = vsel %vm718, %v1100, %v1102
        %v1111 = vsel %vm718, %v1102, %v1096
        %1112 = vrot.lane.b32.xlu0 %v1011, 95
        %v1113 = vpop.permute.xlu0 %1112
        %1114 = vrot.lane.b32.xlu0 %v1012, 95
        %v1115 = vpop.permute.xlu0 %1114
        %1116 = vrot.lane.b32.xlu0 %v1013, 95
        %v1117 = vpop.permute.xlu0 %1116
        %1118 = vrot.lane.b32.xlu0 %v1014, 95
        %v1119 = vpop.permute.xlu0 %1118
        %v1120 = vsel %vm733, %v1113, %v1115
        %v1121 = vsel %vm733, %v1115, %v1117
        %v1122 = vsel %vm733, %v1117, %v1119
        %v1125 = vsel %vm733, %v1119, %v1113
        %1126 = vrot.lane.b32.xlu0 %v1011, 94
        %v1127 = vpop.permute.xlu0 %1126
        %1128 = vrot.lane.b32.xlu0 %v1012, 94
        %v1129 = vpop.permute.xlu0 %1128
        %1130 = vrot.lane.b32.xlu0 %v1013, 94
        %v1131 = vpop.permute.xlu0 %1130
        %1132 = vrot.lane.b32.xlu0 %v1014, 94
        %v1133 = vpop.permute.xlu0 %1132
        %v1134 = vsel %vm748, %v1127, %v1129
        %v1135 = vsel %vm748, %v1129, %v1131
        %v1136 = vsel %vm748, %v1131, %v1133
        %v1139 = vsel %vm748, %v1133, %v1127
        %v1141 = vrot.slane %v1027, 4
        %v1142 = vrot.slane %v1028, 4
        %v1143 = vrot.slane %v1029, 4
        %v1144 = vrot.slane %v1032, 4
        %v1150 = vrot.slane %v1058, 4
        %v1151 = vrot.slane %v1059, 4
        %v1152 = vrot.slane %v1060, 4
        %v1153 = vrot.slane %v1063, 4
        %v1159 = vrot.slane %v1089, 4
        %v1160 = vrot.slane %v1090, 4
        %v1161 = vrot.slane %v1091, 4
        %v1162 = vrot.slane %v1094, 4
        %v1168 = vrot.slane %v1120, 4
        %v1169 = vrot.slane %v1121, 4
        %v1170 = vrot.slane %v1122, 4
        %v1171 = vrot.slane %v1125, 4
        %v1176 = vsel %vm467, %v1011, %v1141
        %v1177 = vsel %vm467, %v1012, %v1142
        %v1178 = vsel %vm467, %v1013, %v1143
        %v1179 = vsel %vm467, %v1014, %v1144
        %v1180 = vsel %vm467, %v1041, %v1150
        %v1181 = vsel %vm467, %v1042, %v1151
        %v1182 = vsel %vm467, %v1043, %v1152
        %v1183 = vsel %vm467, %v1049, %v1153
        %v1184 = vsel %vm467, %v1072, %v1159
        %v1185 = vsel %vm467, %v1073, %v1160
        %v1186 = vsel %vm467, %v1074, %v1161
        %v1187 = vsel %vm467, %v1080, %v1162
        %v1188 = vsel %vm467, %v1103, %v1168
        %v1189 = vsel %vm467, %v1104, %v1169
        %v1190 = vsel %vm467, %v1105, %v1170
        %v1191 = vsel %vm467, %v1111, %v1171
        %v1192 = vld [vmem:[%s5] sm:$0xff]
        %v1193 = vld [vmem:[%s6] sm:$0xff]
        %1195 = vset.pattern.permute.xlu0 0
        %1196 = vperm.xlu0 %1195, %v1193
        %v1197 = vpop.permute.xlu0 %1196
        %vm1199 = vcmask 293888
        %v1201 = vsel %vm1199, %v1192, 0
        %v1203 = vsel %vm467, %v1134, 0
        %v1205 = vsel %vm467, %v1135, 0
        %v1207 = vsel %vm467, %v1136, 0
        %v1210 = vsel %vm467, %v1139, 0
        %1212 = vmatprep.subr.mxu0 %v1177
        %1213 = vmatpush1.msra.mxu0 %v1176
        %1214 = vmatprep.subr.mxu0 %v1181
        %1215 = vmatpush1.msra.mxu0 %v1180
        %1216 = vmatprep.subr.mxu0 %v1185
        %1217 = vmatpush1.msra.mxu0 %v1184
        %1218 = vmatprep.subr.mxu0 %v1189
        %1219 = vmatpush1.msra.mxu0 %v1188
        %1220 = vmatprep.subr.mxu0 %v1205
        %1221 = vmatpush1.msra.mxu0 %v1203
        %1222 = vmatprep.subr.mxu0 0.0
        %1223 = vmatpush1.msra.mxu0 0.0
        %1224 = vmatprep.subr.mxu0 0.0
        %1225 = vmatpush1.msra.mxu0 0.0
        %1226 = vmatprep.subr.mxu0 0.0
        %1227 = vmatpush1.msra.mxu0 0.0
        %1228 = vmatprep.subr.mxu0 0.0
        %1229 = vmatpush1.msra.mxu0 0.0
        %1230 = vmatprep.subr.mxu0 0.0
        %1231 = vmatpush1.msra.mxu0 0.0
        %1232 = vmatprep.subr.mxu0 0.0
        %1233 = vmatpush1.msra.mxu0 0.0
        %1234 = vmatprep.subr.mxu0 0.0
        %1235 = vmatpush1.msra.mxu0 0.0
        %1236 = vmatprep.subr.mxu0 0.0
        %1237 = vmatpush1.msra.mxu0 0.0
        %1238 = vmatprep.subr.mxu0 0.0
        %1239 = vmatpush1.msra.mxu0 0.0
        %1240 = vmatprep.subr.mxu0 0.0
        %1241 = vmatpush1.msra.mxu0 0.0
        %1242 = vmatprep.subr.mxu0 0.0
        %1243 = vmatpush1.msra.mxu0 0.0
        %1244 = vmatprep.subr.mxu0 0.0
        %1245 = vmatpush1.msra.mxu0 0.0
        %1246 = vmatprep.subr.mxu0 0.0
        %1247 = vmatpush1.msra.mxu0 0.0
        %1248 = vmatprep.subr.mxu0 0.0
        %1249 = vmatpush1.msra.mxu0 0.0
        %1250 = vmatprep.subr.mxu0 0.0
        %1251 = vmatpush1.msra.mxu0 0.0
        %1252 = vmatprep.subr.mxu0 0.0
        %1253 = vmatpush1.msra.mxu0 0.0
        %1254 = vmatprep.subr.mxu0 0.0
        %1255 = vmatpush1.msra.mxu0 0.0
        %1256 = vmatprep.subr.mxu0 0.0
        %1257 = vmatpush1.msra.mxu0 0.0
        %1258 = vmatprep.subr.mxu0 0.0
        %1259 = vmatpush1.msra.mxu0 0.0
        %1260 = vmatprep.subr.mxu0 0.0
        %1261 = vmatpush1.msra.mxu0 0.0
        %1262 = vmatprep.subr.mxu0 0.0
        %1263 = vmatpush1.msra.mxu0 0.0
        %1264 = vmatprep.subr.mxu0 0.0
        %1265 = vmatpush1.msra.mxu0 0.0
        %1266 = vmatprep.subr.mxu0 0.0
        %1267 = vmatpush1.msra.mxu0 0.0
        %1268 = vmatprep.subr.mxu0 0.0
        %1269 = vmatpush1.msra.mxu0 0.0
        %1270 = vmatprep.subr.mxu0 0.0
        %1271 = vmatpush1.msra.mxu0 0.0
        %1272 = vmatprep.subr.mxu0 0.0
        %1273 = vmatpush1.msra.mxu0 0.0
        %1274 = vmatprep.subr.mxu0 0.0
        %1275 = vmatpush1.msra.mxu0 0.0
        %1276 = vmatprep.mubr.f32.mxu0 0.0
        %1277 = vmatmul.mubr.f32.gmra.mrb[0].mxu0 %v1201
        %v1278 = vpop.f32.mrb[0].mxu0
        %v1279 = vadd.f32 %v1197, %v1278
        %v1280 = vpop.f32.mrb[0].mxu0
        %v1281 = vadd.f32 %v1197, %v1280
        %1282 = vdwg.mxu0
        %1283 = vmatprep.subr.mxu0 %v1179
        %1284 = vmatpush1.msra.mxu0 %v1178
        %1285 = vmatprep.subr.mxu0 %v1183
        %1286 = vmatpush1.msra.mxu0 %v1182
        %1287 = vmatprep.subr.mxu0 %v1187
        %1288 = vmatpush1.msra.mxu0 %v1186
        %1289 = vmatprep.subr.mxu0 %v1191
        %1290 = vmatpush1.msra.mxu0 %v1190
        %1291 = vmatprep.subr.mxu0 %v1210
        %1292 = vmatpush1.msra.mxu0 %v1207
        %1293 = vmatprep.subr.mxu0 0.0
        %1294 = vmatpush1.msra.mxu0 0.0
        %1295 = vmatprep.subr.mxu0 0.0
        %1296 = vmatpush1.msra.mxu0 0.0
        %1297 = vmatprep.subr.mxu0 0.0
        %1298 = vmatpush1.msra.mxu0 0.0
        %1299 = vmatprep.subr.mxu0 0.0
        %1300 = vmatpush1.msra.mxu0 0.0
        %1301 = vmatprep.subr.mxu0 0.0
        %1302 = vmatpush1.msra.mxu0 0.0
        %1303 = vmatprep.subr.mxu0 0.0
        %1304 = vmatpush1.msra.mxu0 0.0
        %1305 = vmatprep.subr.mxu0 0.0
        %1306 = vmatpush1.msra.mxu0 0.0
        %1307 = vmatprep.subr.mxu0 0.0
        %1308 = vmatpush1.msra.mxu0 0.0
        %1309 = vmatprep.subr.mxu0 0.0
        %1310 = vmatpush1.msra.mxu0 0.0
        %1311 = vmatprep.subr.mxu0 0.0
        %1312 = vmatpush1.msra.mxu0 0.0
        %1313 = vmatprep.subr.mxu0 0.0
        %1314 = vmatpush1.msra.mxu0 0.0
        %1315 = vmatprep.subr.mxu0 0.0
        %1316 = vmatpush1.msra.mxu0 0.0
        %1317 = vmatprep.subr.mxu0 0.0
        %1318 = vmatpush1.msra.mxu0 0.0
        %1319 = vmatprep.subr.mxu0 0.0
        %1320 = vmatpush1.msra.mxu0 0.0
        %1321 = vmatprep.subr.mxu0 0.0
        %1322 = vmatpush1.msra.mxu0 0.0
        %1323 = vmatprep.subr.mxu0 0.0
        %1324 = vmatpush1.msra.mxu0 0.0
        %1325 = vmatprep.subr.mxu0 0.0
        %1326 = vmatpush1.msra.mxu0 0.0
        %1327 = vmatprep.subr.mxu0 0.0
        %1328 = vmatpush1.msra.mxu0 0.0
        %1329 = vmatprep.subr.mxu0 0.0
        %1330 = vmatpush1.msra.mxu0 0.0
        %1331 = vmatprep.subr.mxu0 0.0
        %1332 = vmatpush1.msra.mxu0 0.0
        %1333 = vmatprep.subr.mxu0 0.0
        %1334 = vmatpush1.msra.mxu0 0.0
        %1335 = vmatprep.subr.mxu0 0.0
        %1336 = vmatpush1.msra.mxu0 0.0
        %1337 = vmatprep.subr.mxu0 0.0
        %1338 = vmatpush1.msra.mxu0 0.0
        %1339 = vmatprep.subr.mxu0 0.0
        %1340 = vmatpush1.msra.mxu0 0.0
        %1341 = vmatprep.subr.mxu0 0.0
        %1342 = vmatpush1.msra.mxu0 0.0
        %1343 = vmatprep.subr.mxu0 0.0
        %1344 = vmatpush1.msra.mxu0 0.0
        %1345 = vmatprep.subr.mxu0 0.0
        %1346 = vmatpush1.msra.mxu0 0.0
        %1347 = vmatprep.mubr.f32.mxu0 0.0
        %1348 = vmatmul.mubr.f32.gmra.mrb[0].mxu0 %v1201
        %v1349 = vpop.f32.mrb[0].mxu0
        %v1350 = vadd.f32 %v1197, %v1349
        %v1351 = vpop.f32.mrb[0].mxu0
        %v1352 = vadd.f32 %v1197, %v1351
        %1353 = vdwg.mxu0
        %v1354 = vmax.f32 %v1279, 0.0
        %v1355 = vmax.f32 %v1281, 0.0
        %v1356 = vmax.f32 %v1350, 0.0
        %v1357 = vmax.f32 %v1352, 0.0
        %v1358 = vmul.f32 %v1011, %v1011
        %v1359 = vmul.f32 %v1012, %v1012
        %v1360 = vmul.f32 %v1013, %v1013
        %v1361 = vmul.f32 %v1014, %v1014
        %v1362 = vsel %vm467, %v1358, 0.0
        %v1363 = vrot.slane %v1362, 4
        %v1364 = vadd.f32 %v1362, %v1363
        %v1365 = vrot.slane %v1364, 2
        %v1366 = vadd.f32 %v1364, %v1365
        %v1367 = vrot.slane %v1366, 1
        %v1368 = vadd.f32 %v1366, %v1367
        %v1369 = vsel %vm467, %v1359, 0.0
        %v1370 = vrot.slane %v1369, 4
        %v1371 = vadd.f32 %v1369, %v1370
        %v1372 = vrot.slane %v1371, 2
        %v1373 = vadd.f32 %v1371, %v1372
        %v1374 = vrot.slane %v1373, 1
        %v1375 = vadd.f32 %v1373, %v1374
        %v1376 = vsel %vm467, %v1360, 0.0
        %v1377 = vrot.slane %v1376, 4
        %v1378 = vadd.f32 %v1376, %v1377
        %v1379 = vrot.slane %v1378, 2
        %v1380 = vadd.f32 %v1378, %v1379
        %v1381 = vrot.slane %v1380, 1
        %v1382 = vadd.f32 %v1380, %v1381
        %v1383 = vsel %vm467, %v1361, 0.0
        %v1384 = vrot.slane %v1383, 4
        %v1385 = vadd.f32 %v1383, %v1384
        %v1386 = vrot.slane %v1385, 2
        %v1387 = vadd.f32 %v1385, %v1386
        %v1388 = vrot.slane %v1387, 1
        %v1389 = vadd.f32 %v1387, %v1388
        %v1390 = vrsqrt.pop %v1368
        %v1391 = vmul.f32 %v1368, %v1390
        %vm1392 = vcmp.eq.f32.partialorder %v1368, inf
        %v1393 = vsel %vm1392, %v1368, %v1391
        %vm1394 = vcmp.eq.f32.partialorder %v1368, 0.0
        %v1395 = vand.u32 %v1368, 2147483648
        %v1396 = vsel %vm1394, %v1395, %v1393
        %v1397 = vrsqrt.pop %v1375
        %v1398 = vmul.f32 %v1375, %v1397
        %vm1399 = vcmp.eq.f32.partialorder %v1375, inf
        %v1400 = vsel %vm1399, %v1375, %v1398
        %vm1401 = vcmp.eq.f32.partialorder %v1375, 0.0
        %v1402 = vand.u32 %v1375, 2147483648
        %v1403 = vsel %vm1401, %v1402, %v1400
        %v1404 = vrsqrt.pop %v1382
        %v1405 = vmul.f32 %v1382, %v1404
        %vm1406 = vcmp.eq.f32.partialorder %v1382, inf
        %v1407 = vsel %vm1406, %v1382, %v1405
        %vm1408 = vcmp.eq.f32.partialorder %v1382, 0.0
        %v1409 = vand.u32 %v1382, 2147483648
        %v1410 = vsel %vm1408, %v1409, %v1407
        %v1411 = vrsqrt.pop %v1389
        %v1412 = vmul.f32 %v1389, %v1411
        %vm1413 = vcmp.eq.f32.partialorder %v1389, inf
        %v1414 = vsel %vm1413, %v1389, %v1412
        %vm1415 = vcmp.eq.f32.partialorder %v1389, 0.0
        %v1416 = vand.u32 %v1389, 2147483648
        %v1417 = vsel %vm1415, %v1416, %v1414
        %v1418 = vadd.f32 %v1396, 1e-10
        %v1419 = vadd.f32 %v1403, 1e-10
        %v1420 = vadd.f32 %v1410, 1e-10
        %v1421 = vadd.f32 %v1417, 1e-10
        %v1422 = vrcp.pop %v1418
        %v1423 = vrcp.pop %v1419
        %v1424 = vrcp.pop %v1420
        %v1425 = vrcp.pop %v1421
        %v1426 = vmul.f32 %v1011, %v1422
        %v1427 = vmul.f32 %v1012, %v1423
        %v1428 = vmul.f32 %v1013, %v1424
        %v1429 = vmul.f32 %v1014, %v1425
        %v1430 = vmul.f32 %v1354, %v1354
        %v1431 = vmul.f32 %v1355, %v1355
        %v1432 = vmul.f32 %v1356, %v1356
        %v1433 = vmul.f32 %v1357, %v1357
        %v1434 = vrot.slane %v1430, 4
        %v1435 = vadd.f32 %v1430, %v1434
        %v1436 = vrot.slane %v1435, 2
        %v1437 = vadd.f32 %v1435, %v1436
        %v1438 = vrot.slane %v1437, 1
        %v1439 = vadd.f32 %v1437, %v1438
        %v1440 = vrot.slane %v1431, 4
        %v1441 = vadd.f32 %v1431, %v1440
        %v1442 = vrot.slane %v1441, 2
        %v1443 = vadd.f32 %v1441, %v1442
        %v1444 = vrot.slane %v1443, 1
        %v1445 = vadd.f32 %v1443, %v1444
        %v1446 = vrot.slane %v1432, 4
        %v1447 = vadd.f32 %v1432, %v1446
        %v1448 = vrot.slane %v1447, 2
        %v1449 = vadd.f32 %v1447, %v1448
        %v1450 = vrot.slane %v1449, 1
        %v1451 = vadd.f32 %v1449, %v1450
        %v1452 = vrot.slane %v1433, 4
        %v1453 = vadd.f32 %v1433, %v1452
        %v1454 = vrot.slane %v1453, 2
        %v1455 = vadd.f32 %v1453, %v1454
        %v1456 = vrot.slane %v1455, 1
        %v1457 = vadd.f32 %v1455, %v1456
        %v1458 = vrsqrt.pop %v1439
        %v1459 = vmul.f32 %v1439, %v1458
        %vm1460 = vcmp.eq.f32.partialorder %v1439, inf
        %v1461 = vsel %vm1460, %v1439, %v1459
        %vm1462 = vcmp.eq.f32.partialorder %v1439, 0.0
        %v1463 = vand.u32 %v1439, 2147483648
        %v1464 = vsel %vm1462, %v1463, %v1461
        %v1465 = vrsqrt.pop %v1445
        %v1466 = vmul.f32 %v1445, %v1465
        %vm1467 = vcmp.eq.f32.partialorder %v1445, inf
        %v1468 = vsel %vm1467, %v1445, %v1466
        %vm1469 = vcmp.eq.f32.partialorder %v1445, 0.0
        %v1470 = vand.u32 %v1445, 2147483648
        %v1471 = vsel %vm1469, %v1470, %v1468
        %v1472 = vrsqrt.pop %v1451
        %v1473 = vmul.f32 %v1451, %v1472
        %vm1474 = vcmp.eq.f32.partialorder %v1451, inf
        %v1475 = vsel %vm1474, %v1451, %v1473
        %vm1476 = vcmp.eq.f32.partialorder %v1451, 0.0
        %v1477 = vand.u32 %v1451, 2147483648
        %v1478 = vsel %vm1476, %v1477, %v1475
        %v1479 = vrsqrt.pop %v1457
        %v1480 = vmul.f32 %v1457, %v1479
        %vm1481 = vcmp.eq.f32.partialorder %v1457, inf
        %v1482 = vsel %vm1481, %v1457, %v1480
        %vm1483 = vcmp.eq.f32.partialorder %v1457, 0.0
        %v1484 = vand.u32 %v1457, 2147483648
        %v1485 = vsel %vm1483, %v1484, %v1482
        %v1486 = vadd.f32 %v1464, 1e-10
        %v1487 = vadd.f32 %v1471, 1e-10
        %v1488 = vadd.f32 %v1478, 1e-10
        %v1489 = vadd.f32 %v1485, 1e-10
        %v1490 = vrcp.pop %v1486
        %v1491 = vrcp.pop %v1487
        %v1492 = vrcp.pop %v1488
        %v1493 = vrcp.pop %v1489
        %v1494 = vmul.f32 %v1354, %v1490
        %v1495 = vmul.f32 %v1355, %v1491
        %v1496 = vmul.f32 %v1356, %v1492
        %v1497 = vmul.f32 %v1357, %v1493
        %v1498 = vsub.f32 %v1426, %v1428
        %v1499 = vsub.f32 %v1427, %v1429
        %v1500 = vsub.f32 %v1494, %v1496
        %v1501 = vsub.f32 %v1495, %v1497
        %v1502 = vld [vmem:[%s2] ss:$2 sm:$0x3]
        %s1503 = scalar_lea.vmem %s2, 1
        %v1504 = vld [vmem:[%s1503] ss:$2 sm:$0x3]
        %v1505 = vmul.f32 %v1498, %v1498
        %v1506 = vmul.f32 %v1499, %v1499
        %v1507 = vld [vmem:[%s7] sm:$0xf]
        %1509 = vset.pattern.permute.xlu0 0
        %1510 = vperm.xlu0 %1509, %v1507
        %v1511 = vpop.permute.xlu0 %1510
        %v1513 = vmul.f32 %v1505, %v1511
        %v1514 = vmul.f32 %v1506, %v1511
        %v1516 = vlaneseq
        %v1517 = vshrl.u32 %v1516, 7
        %v1518 = vsub.s32 0, %v1517
        %v1519 = vrot.slane %v1502, %v1518
        %v1520 = vlaneseq
        %v1521 = vshrl.u32 %v1520, 7
        %v1522 = vsub.s32 1, %v1521
        %v1523 = vrot.slane %v1502, %v1522
        %v1526 = vmul.f32 %v1513, %v1519
        %v1527 = vmul.f32 %v1514, %v1523
        %v1528 = vsel %vm467, %v1526, 0.0
        %v1529 = vsel %vm467, %v1527, 0.0
        %v1530 = vadd.f32 %v1528, %v1529
        %1531 = vadd.xlane.f32.xlu0 %v1530
        %v1532 = vpop.xlane.xlu0 %1531
        %v1533 = vrot.slane %v1532, 4
        %v1534 = vadd.f32 %v1532, %v1533
        %v1535 = vrot.slane %v1534, 2
        %v1536 = vadd.f32 %v1534, %v1535
        %v1537 = vrot.slane %v1536, 1
        %v1538 = vadd.f32 %v1536, %v1537
        %s1539 = vtos %v1538
        %v1540 = vmul.f32 %v1500, %v1500
        %v1541 = vmul.f32 %v1501, %v1501
        %v1542 = vld [vmem:[%s8] sm:$0xff]
        %1544 = vset.pattern.permute.xlu0 0
        %1545 = vperm.xlu0 %1544, %v1542
        %v1546 = vpop.permute.xlu0 %1545
        %v1548 = vmul.f32 %v1540, %v1546
        %v1549 = vmul.f32 %v1541, %v1546
        %v1551 = vlaneseq
        %v1552 = vshrl.u32 %v1551, 7
        %v1553 = vsub.s32 0, %v1552
        %v1554 = vrot.slane %v1504, %v1553
        %v1555 = vlaneseq
        %v1556 = vshrl.u32 %v1555, 7
        %v1557 = vsub.s32 1, %v1556
        %v1558 = vrot.slane %v1504, %v1557
        %v1561 = vmul.f32 %v1548, %v1554
        %v1562 = vmul.f32 %v1549, %v1558
        %v1563 = vadd.f32 %v1561, %v1562
        %1564 = vadd.xlane.f32.xlu0 %v1563
        %v1565 = vpop.xlane.xlu0 %1564
        %v1566 = vrot.slane %v1565, 4
        %v1567 = vadd.f32 %v1565, %v1566
        %v1568 = vrot.slane %v1567, 2
        %v1569 = vadd.f32 %v1567, %v1568
        %v1570 = vrot.slane %v1569, 1
        %v1571 = vadd.f32 %v1569, %v1570
        %s1572 = vtos %v1571
        %s1573 = sadd.f32 %s1539, %s1572
        %v1574 = vstv %s634
        %1575 = vst [vmem:[%s383] sm:$0xff] %v1574
        %v1576 = vstv %s431
        %1577 = vst [vmem:[%s390] sm:$0xff] %v1576
        %v1578 = vstv %s1573
        %1579 = vst [vmem:[%s397] sm:$0xff] %v1578
        %s1580 = sand.u32 %s231, 1
        %s1581 = scalar_lea.sflag [#allocation3], %s1580
        %s1582 = sand.u32 %s231, 1
        %s1583 = smul.addr %s1582, 8
        %s1584 = scalar_lea.vmem [#allocation2], %s1583
        %s1585 = sand.u32 %s29, 1
        %s1586 = scalar_lea.sflag [#allocation5], %s1585
        %s1587 = sand.u32 %s257, 1
        %s1588 = smul.addr %s1587, 8
        %s1589 = scalar_lea.vmem [#allocation4], %s1588
        %s1590 = sand.u32 %s29, 1
        %s1591 = scalar_lea.sflag [#allocation5], %s1590
        %s1592 = sand.u32 %s283, 1
        %s1593 = smul.addr %s1592, 8
        %s1594 = scalar_lea.vmem [#allocation6], %s1593
        // Predicated region
        $region57: #{tpu_custom_call.1} parent=55 // pred_check
          %p1595 = pneg %p241
        $region58: #{tpu_custom_call.1} parent=55 // pred_check_branch
          %1597 = sbr.rel (%p1595) target = $region60
        $region59: #{tpu_custom_call.1} parent=55 // pred_region
          %s1599 = ssub.s32 128, 128
          %1600 = vsyncadd %s1581, %s1599
          %s1601 = smul.addr %s29, 128
          %s1602 = scalar_lea.hbm %s9, %s1601
          %s1604 = sshll.u32 %s1584, 4
          %s1605 = int_to_ptr.vmem [resolvable:$true] %s1604
          %1607 = dma.vmem_to_hbm [thread:$0]  %s1605, 128, %s1602, %s1581
        $region60: #{tpu_custom_call.1} parent=55 // pred_fallthru
          _
        // Predicated region
        $region61: #{tpu_custom_call.1} parent=55 // pred_check
          %p1608 = pneg %p267
        $region62: #{tpu_custom_call.1} parent=55 // pred_check_branch
          %1610 = sbr.rel (%p1608) target = $region64
        $region63: #{tpu_custom_call.1} parent=55 // pred_region
          %s1612 = ssub.s32 128, 128
          %1613 = vsyncadd %s1586, %s1612
          %s1614 = smul.addr %s29, 128
          %s1615 = scalar_lea.hbm %s10, %s1614
          %s1617 = sshll.u32 %s1589, 4
          %s1618 = int_to_ptr.vmem [resolvable:$true] %s1617
          %1620 = dma.vmem_to_hbm [thread:$0]  %s1618, 128, %s1615, %s1586
        $region64: #{tpu_custom_call.1} parent=55 // pred_fallthru
          _
        // Predicated region
        $region65: #{tpu_custom_call.1} parent=55 // pred_check
          %p1621 = pneg %p293
        $region66: #{tpu_custom_call.1} parent=55 // pred_check_branch
          %1623 = sbr.rel (%p1621) target = $region68
        $region67: #{tpu_custom_call.1} parent=55 // pred_region
          %s1625 = ssub.s32 128, 128
          %1626 = vsyncadd %s1591, %s1625
          %s1627 = smul.addr %s29, 128
          %s1628 = scalar_lea.hbm %s11, %s1627
          %s1630 = sshll.u32 %s1594, 4
          %s1631 = int_to_ptr.vmem [resolvable:$true] %s1630
          %1633 = dma.vmem_to_hbm [thread:$0]  %s1631, 128, %s1628, %s1591
        $region68: #{tpu_custom_call.1} parent=55 // pred_fallthru
          _
      $region56: #{tpu_custom_call.1} parent=5 // pred_fallthru
        _
      %p1634 = scmp.le.s32.totalorder 2, %s24
      // Predicated region
      $region69: #{tpu_custom_call.1} parent=5 // pred_check
        %p1635 = pneg %p1634
      $region70: #{tpu_custom_call.1} parent=5 // pred_check_branch
        %1637 = sbr.rel (%p1635) target = $region72
      $region71: #{tpu_custom_call.1} parent=5 // pred_region
        %s1638 = ssub.s32 %s24, 2
        // Predicated region
        $region73: #{tpu_custom_call.1} parent=71 // pred_check
          %p1639 = pneg %p247
        $region74: #{tpu_custom_call.1} parent=71 // pred_check_branch
          %1641 = sbr.rel (%p1639) target = $region76
        $region75: #{tpu_custom_call.1} parent=71 // pred_region
          %s1642 = sand.u32 %s232, 1
          %s1643 = scalar_lea.sflag [#allocation3], %s1642
          %s1644 = sand.u32 %s232, 1
          %s1645 = smul.addr %s1644, 8
          %s1646 = scalar_lea.vmem [#allocation2], %s1645
          %1647 = dma.done %s1643, 128
        $region76: #{tpu_custom_call.1} parent=71 // pred_fallthru
          _
        // Predicated region
        $region77: #{tpu_custom_call.1} parent=71 // pred_check
          %p1648 = pneg %p273
        $region78: #{tpu_custom_call.1} parent=71 // pred_check_branch
          %1650 = sbr.rel (%p1648) target = $region80
        $region79: #{tpu_custom_call.1} parent=71 // pred_region
          %s1651 = sand.u32 %s30, 1
          %s1652 = scalar_lea.sflag [#allocation5], %s1651
          %s1653 = sand.u32 %s258, 1
          %s1654 = smul.addr %s1653, 8
          %s1655 = scalar_lea.vmem [#allocation4], %s1654
          %1656 = dma.done %s1652, 128
        $region80: #{tpu_custom_call.1} parent=71 // pred_fallthru
          _
        // Predicated region
        $region81: #{tpu_custom_call.1} parent=71 // pred_check
          %p1657 = pneg %p299
        $region82: #{tpu_custom_call.1} parent=71 // pred_check_branch
          %1659 = sbr.rel (%p1657) target = $region84
        $region83: #{tpu_custom_call.1} parent=71 // pred_region
          %s1660 = sand.u32 %s30, 1
          %s1661 = scalar_lea.sflag [#allocation5], %s1660
          %s1662 = sand.u32 %s284, 1
          %s1663 = smul.addr %s1662, 8
          %s1664 = scalar_lea.vmem [#allocation6], %s1663
          %1665 = dma.done %s1661, 128
        $region84: #{tpu_custom_call.1} parent=71 // pred_fallthru
          _
      $region72: #{tpu_custom_call.1} parent=5 // pred_fallthru
        _
    $region6: #{tpu_custom_call.1} parent=1 // loop_footer
      %s28 = sadd.s32 1, %s24
    $region7: #{tpu_custom_call.1} parent=1 // loop_footer_branch
      %23 = sbr.rel target = $region3
    $region8: #{tpu_custom_call.1} parent=1 // loop_exit
      _
    %1666 = vsyncpa [#allocation3], 1
    %s1667 = scalar_lea.sflag [#allocation3], 1
    %1668 = vsyncpa %s1667, 1
    %1669 = vsyncpa [#allocation5], 1
    %s1670 = scalar_lea.sflag [#allocation5], 1
    %1671 = vsyncpa %s1670, 1

</llo_original>
